<compile_context>
chip_gen: v5e
topology: v5e:2x2
jax: 0.10.0
libtpu: 0.0.40
codegen_flags: <defaults>
</compile_context>

<pallas_src>
import functools

import jax
import jax.numpy as jnp
import numpy as np
from jax import lax
from jax.experimental import pallas as pl
from jax.experimental.pallas import tpu as pltpu


def _round_up(x, m):
    return (x + m - 1) // m * m


def _bert_embeddings_kernel(ids_smem,            # (B*S_pad,) int32 scalar-prefetch (SMEM)
                            tok_ref,             # (1, tile_s, 1) f32 token-type ids
                            pos_ref,             # (tile_s, H) position rows (auto-pipelined)
                            word_hbm,            # (V, H) word table, stays in HBM (pl.ANY)
                            type_ref,            # (T, H) token-type table, VMEM resident
                            gamma_ref, beta_ref, # (1, H) LayerNorm params, VMEM resident
                            out_ref,             # (1, tile_s, H) output block
                            w_buf, sem,          # (2, tile_s, H) scratch + (2,) DMA sems
                            *, eps, tile_s, type_vocab, unroll):
    h = out_ref.shape[-1]
    b = pl.program_id(0)
    s = pl.program_id(1)
    n_s = pl.num_programs(1)

    def issue_tile(tile_idx, slot):
        base = (b * n_s + tile_idx) * tile_s

        def issue(r, carry):
            wid = ids_smem[base + r]
            pltpu.make_async_copy(word_hbm.at[pl.ds(wid, 1), :],
                                  w_buf.at[slot, pl.ds(r, 1), :],
                                  sem.at[slot]).start()
            return carry

        lax.fori_loop(0, tile_s, issue, 0, unroll=unroll)

    # Warm-up: first tile of this sequence (also the first tile each TensorCore
    # sees when the batch axis is sharded, so the prefetch never dangles).
    @pl.when(s == 0)
    def _():
        issue_tile(0, 0)

    # Prefetch the next tile of the same sequence — overlaps the HBM row gather
    # with this tile's LayerNorm and output writeback.
    @pl.when(s + 1 < n_s)
    def _():
        issue_tile(s + 1, (s + 1) & 1)

    # ---- token-type embedding: tiny VMEM table, pure VPU (no MXU, no DMA) ----
    tok = tok_ref[0]                                   # (tile_s, 1) float32
    if type_vocab == 2:
        r0 = type_ref[pl.ds(0, 1), :].astype(jnp.float32)
        r1 = type_ref[pl.ds(1, 1), :].astype(jnp.float32)
        t = r0 + tok * (r1 - r0)                       # lerp: one mul + adds
    else:
        t = jnp.zeros((tile_s, h), jnp.float32)
        for k in range(type_vocab):                    # static tiny loop
            row = type_ref[pl.ds(k, 1), :].astype(jnp.float32)
            t = jnp.where(tok == k, row, t)

    p = pos_ref[...].astype(jnp.float32)               # position rows (BlockSpec-fetched)
    g = gamma_ref[...].astype(jnp.float32)
    bb = beta_ref[...].astype(jnp.float32)

    # ---- single aggregate wait for all word-row gathers of the current slot ----
    slot = s & 1
    pltpu.make_async_copy(w_buf.at[slot], w_buf.at[slot], sem.at[slot]).wait()

    # ---- sum + LayerNorm in fp32 (biased variance, eps inside rsqrt) ----
    x = w_buf[slot].astype(jnp.float32) + p + t
    mean = jnp.mean(x, axis=-1, keepdims=True)
    var = jnp.mean((x - mean) ** 2, axis=-1, keepdims=True)
    y = (x - mean) * lax.rsqrt(var + eps)
    out_ref[0] = (y * g + bb).astype(out_ref.dtype)
    # dropout: identity in eval/inference mode.
    # TODO(synk): training-mode dropout (hidden_dropout_prob) not implemented.


def bert_embeddings(input_ids, token_type_ids, position_ids, params,
                    eps=1e-12, seq_tile=256, out_dtype=jnp.float32):
    B, S = input_ids.shape
    word_tab = params["word"]
    pos_tab = params["pos"]
    type_tab = params["type"]
    V, H = word_tab.shape
    P = pos_tab.shape[0]
    T = type_tab.shape[0]

    if token_type_ids is None:
        token_type_ids = jnp.zeros_like(input_ids)

    # Sequence tiling: pad S to a multiple of 8, cap the tile at `seq_tile`.
    S_pad = _round_up(S, 8)
    if S_pad <= seq_tile:
        tile_s = S_pad
    else:
        tile_s = _round_up(seq_tile, 8)
        S_pad = _round_up(S_pad, tile_s)
    n_s = S_pad // tile_s
    pad = S_pad - S

    # Clamp so the word-row DMA gather can never read out of bounds.
    ids = jnp.clip(input_ids.astype(jnp.int32), 0, V - 1)
    tok = jnp.clip(token_type_ids.astype(jnp.int32), 0, T - 1)
    if pad:
        ids = jnp.pad(ids, ((0, 0), (0, pad)))
        tok = jnp.pad(tok, ((0, 0), (0, pad)))
    ids_flat = ids.reshape(B * S_pad)
    tokf = tok.astype(jnp.float32).reshape(B, S_pad, 1)

    # Position embeddings: default (arange) path reads the table directly with a
    # contiguous BlockSpec — no gather at all.  Custom ids fall back to a
    # wrapper-side gather streamed through the same-shaped BlockSpec.
    if position_ids is None and S_pad <= P:
        pos_src = pos_tab
        pos_spec = pl.BlockSpec((tile_s, H), lambda b, s, *_: (s, 0))
    else:
        if position_ids is None:
            position_ids = jnp.broadcast_to(
                jnp.arange(S, dtype=jnp.int32)[None, :], (B, S))
        posid = jnp.clip(position_ids.astype(jnp.int32), 0, P - 1)
        if pad:
            posid = jnp.pad(posid, ((0, 0), (0, pad)))
        pos_src = jnp.take(pos_tab, posid.reshape(B * S_pad), axis=0)
        pos_spec = pl.BlockSpec((tile_s, H), lambda b, s, *_: (b * n_s + s, 0))

    gamma = params["gamma"].reshape(1, H).astype(jnp.float32)
    beta = params["beta"].reshape(1, H).astype(jnp.float32)

    kernel = functools.partial(_bert_embeddings_kernel, eps=eps, tile_s=tile_s,
                               type_vocab=T, unroll=min(tile_s, 8))

    n_tok = B * S
    out_itemsize = jnp.dtype(out_dtype).itemsize
    cost = pl.CostEstimate(
        flops=int(10 * n_tok * H),
        transcendentals=0,
        bytes_accessed=int(n_tok * H * (word_tab.dtype.itemsize
                                        + pos_tab.dtype.itemsize
                                        + out_itemsize)))

    out = pl.pallas_call(
        kernel,
        out_shape=jax.ShapeDtypeStruct((B, S_pad, H), out_dtype),
        grid_spec=pltpu.PrefetchScalarGridSpec(
            num_scalar_prefetch=1,                       # word ids -> SMEM
            grid=(B, n_s),
            in_specs=[
                pl.BlockSpec((1, tile_s, 1), lambda b, s, *_: (b, s, 0)),  # token-type
                pos_spec,                                                  # position rows
                pl.BlockSpec(memory_space=pl.ANY),                         # word table (HBM)
                pl.BlockSpec((T, H), lambda b, s, *_: (0, 0)),             # type table
                pl.BlockSpec((1, H), lambda b, s, *_: (0, 0)),             # gamma
                pl.BlockSpec((1, H), lambda b, s, *_: (0, 0)),             # beta
            ],
            out_specs=pl.BlockSpec((1, tile_s, H), lambda b, s, *_: (b, s, 0)),
            scratch_shapes=[
                pltpu.VMEM((2, tile_s, H), word_tab.dtype),  # double-buffered word rows
                pltpu.SemaphoreType.DMA((2,)),               # one sem per slot
            ],
        ),
        compiler_params=pltpu.CompilerParams(
            dimension_semantics=("parallel", "arbitrary"),   # batch shards across TCs
        ),
        cost_estimate=cost,
    )(ids_flat, tokf, pos_src, word_tab, type_tab, gamma, beta)

    return out[:, :S, :]


def reference(input_ids, token_type_ids, position_ids, params, eps=1e-12):
    B, S = input_ids.shape
    if position_ids is None:
        position_ids = jnp.broadcast_to(
            jnp.arange(S, dtype=jnp.int32)[None, :], (B, S))
    if token_type_ids is None:
        token_type_ids = jnp.zeros_like(input_ids)
    x = (jnp.take(params["word"], input_ids, axis=0)
         + jnp.take(params["pos"], position_ids, axis=0)
         + jnp.take(params["type"], token_type_ids, axis=0)).astype(jnp.float32)
    mean = jnp.mean(x, axis=-1, keepdims=True)
    var = jnp.mean((x - mean) ** 2, axis=-1, keepdims=True)
    y = (x - mean) * lax.rsqrt(var + eps)
    return y * params["gamma"] + params["beta"]


if __name__ == "__main__":
    # Small synthetic config (consistent with the module's forward).
    vocab_size = 64
    max_position_embeddings = 32
    type_vocab_size = 2
    hidden_size = 128
    layer_norm_eps = 1e-12
    B, S = 2, 8

    key = jax.random.PRNGKey(0)
    k_w, k_p, k_t, k_ids, k_tt = jax.random.split(key, 5)

    word = 0.02 * jax.random.normal(k_w, (vocab_size, hidden_size), jnp.float32)
    word = word.at[0].set(0.0)  # nn.Embedding padding_idx=0 zero row
    pos_tab = 0.02 * jax.random.normal(
        k_p, (max_position_embeddings, hidden_size), jnp.float32)
    type_tab = 0.02 * jax.random.normal(
        k_t, (type_vocab_size, hidden_size), jnp.float32)
    params = {
        "word": word,
        "pos": pos_tab,
        "type": type_tab,
        "gamma": jnp.ones((hidden_size,), jnp.float32),
        "beta": jnp.zeros((hidden_size,), jnp.float32),
    }

    input_ids = jax.random.randint(k_ids, (B, S), 0, vocab_size, dtype=jnp.int32)
    token_type_ids = jax.random.randint(k_tt, (B, S), 0, type_vocab_size, dtype=jnp.int32)

    # Default path (position_ids=None -> arange, pos table read via BlockSpec).
    out = bert_embeddings(input_ids, token_type_ids, None, params, eps=layer_norm_eps)
    out = jax.block_until_ready(out)
    ref = reference(input_ids, token_type_ids, None, params, eps=layer_norm_eps)
    np.testing.assert_allclose(np.asarray(out), np.asarray(ref), rtol=1e-5, atol=1e-5)

    # Explicit position_ids path (wrapper-side gather fallback).
    pos_ids = jnp.broadcast_to(jnp.arange(S, dtype=jnp.int32)[None, :], (B, S))
    out2 = bert_embeddings(input_ids, token_type_ids, pos_ids, params, eps=layer_norm_eps)
    out2 = jax.block_until_ready(out2)
    np.testing.assert_allclose(np.asarray(out2), np.asarray(ref), rtol=1e-5, atol=1e-5)

    print("KERNEL_OK")
</pallas_src>

<mosaic_0001>
module attributes {stable_mosaic.version = 11 : i64} {
  func.func @_bert_embeddings_kernel(%arg0: i32, %arg1: i32, %arg2: memref<16xi32, #tpu.memory_space<smem>>, %arg3: memref<1x8x1xf32, #tpu.memory_space<vmem>>, %arg4: memref<8x128xf32, #tpu.memory_space<vmem>>, %arg5: memref<64x128xf32, #tpu.memory_space<any>>, %arg6: memref<2x128xf32, #tpu.memory_space<vmem>>, %arg7: memref<1x128xf32, #tpu.memory_space<vmem>>, %arg8: memref<1x128xf32, #tpu.memory_space<vmem>>, %arg9: memref<1x8x128xf32, #tpu.memory_space<vmem>>, %arg10: memref<2x8x128xf32, #tpu.memory_space<vmem>>, %arg11: memref<2x!tpu.dma_semaphore, #tpu.memory_space<semaphore_mem>>) attributes {dimension_semantics = [#tpu.dimension_semantics<parallel>, #tpu.dimension_semantics<arbitrary>], iteration_bounds = array<i64: 2, 1>, scalar_prefetch = 1 : i64, scratch_operands = 2 : i64, tpu.core_type = #tpu.core_type<tc>, window_params = [{transform_indices = @transform_0, window_bounds = array<i64: 1, 8, 1>}, {transform_indices = @transform_1, window_bounds = array<i64: 8, 128>}, {}, {pipeline_mode = #tpu.pipeline_mode<synchronous>, transform_indices = @transform_3, window_bounds = array<i64: 2, 128>}, {pipeline_mode = #tpu.pipeline_mode<synchronous>, transform_indices = @transform_4, window_bounds = array<i64: 1, 128>}, {pipeline_mode = #tpu.pipeline_mode<synchronous>, transform_indices = @transform_5, window_bounds = array<i64: 1, 128>}, {transform_indices = @transform_6, window_bounds = array<i64: 1, 8, 128>}]} {
    %c0_i32 = arith.constant 0 : i32
    %0 = arith.cmpi eq, %arg1, %c0_i32 : i32
    %1 = arith.extui %0 : i1 to i32
    %c0_i32_0 = arith.constant 0 : i32
    %2 = arith.cmpi ne, %1, %c0_i32_0 : i32
    scf.if %2 {
      %c1_i32_28 = arith.constant 1 : i32
      %57 = arith.muli %arg0, %c1_i32_28 : i32
      %c0_i32_29 = arith.constant 0 : i32
      %58 = arith.addi %57, %c0_i32_29 : i32
      %c8_i32 = arith.constant 8 : i32
      %59 = arith.muli %58, %c8_i32 : i32
      %c0_i32_30 = arith.constant 0 : i32
      %60 = arith.addi %59, %c0_i32_30 : i32
      %61 = arith.index_cast %60 : i32 to index
      %62 = memref.load %arg2[%61] : memref<16xi32, #tpu.memory_space<smem>>
      %c0_i32_31 = arith.constant 0 : i32
      %c0_i32_32 = arith.constant 0 : i32
      %c0_i32_33 = arith.constant 0 : i32
      %63 = tpu.memref_slice %arg5[%62, %c0_i32_33] : memref<64x128xf32, #tpu.memory_space<any>> -> memref<1x128xf32, #tpu.memory_space<any>>
      %c0_i32_34 = arith.constant 0 : i32
      %64 = tpu.memref_slice %arg10[%c0_i32_31, %c0_i32_30, %c0_i32_34] : memref<2x8x128xf32, #tpu.memory_space<vmem>> -> memref<1x1x128xf32, #tpu.memory_space<vmem>>
      %65 = tpu.memref_squeeze %64 : memref<1x1x128xf32, #tpu.memory_space<vmem>> -> memref<1x128xf32, #tpu.memory_space<vmem>>
      %66 = tpu.memref_slice %arg11[%c0_i32_32] : memref<2x!tpu.dma_semaphore, #tpu.memory_space<semaphore_mem>> -> memref<1x!tpu.dma_semaphore, #tpu.memory_space<semaphore_mem>>
      %67 = tpu.memref_squeeze %66 : memref<1x!tpu.dma_semaphore, #tpu.memory_space<semaphore_mem>> -> memref<!tpu.dma_semaphore, #tpu.memory_space<semaphore_mem>>
      tpu.enqueue_dma source(%63 : memref<1x128xf32, #tpu.memory_space<any>>) target(%65 : memref<1x128xf32, #tpu.memory_space<vmem>>) target_semaphore(%67 : memref<!tpu.dma_semaphore, #tpu.memory_space<semaphore_mem>>)
      %c1_i32_35 = arith.constant 1 : i32
      %68 = arith.addi %59, %c1_i32_35 : i32
      %69 = arith.index_cast %68 : i32 to index
      %70 = memref.load %arg2[%69] : memref<16xi32, #tpu.memory_space<smem>>
      %c0_i32_36 = arith.constant 0 : i32
      %c0_i32_37 = arith.constant 0 : i32
      %c0_i32_38 = arith.constant 0 : i32
      %71 = tpu.memref_slice %arg5[%70, %c0_i32_38] : memref<64x128xf32, #tpu.memory_space<any>> -> memref<1x128xf32, #tpu.memory_space<any>>
      %c0_i32_39 = arith.constant 0 : i32
      %72 = tpu.memref_slice %arg10[%c0_i32_36, %c1_i32_35, %c0_i32_39] : memref<2x8x128xf32, #tpu.memory_space<vmem>> -> memref<1x1x128xf32, #tpu.memory_space<vmem>>
      %73 = tpu.memref_squeeze %72 : memref<1x1x128xf32, #tpu.memory_space<vmem>> -> memref<1x128xf32, #tpu.memory_space<vmem>>
      %74 = tpu.memref_slice %arg11[%c0_i32_37] : memref<2x!tpu.dma_semaphore, #tpu.memory_space<semaphore_mem>> -> memref<1x!tpu.dma_semaphore, #tpu.memory_space<semaphore_mem>>
      %75 = tpu.memref_squeeze %74 : memref<1x!tpu.dma_semaphore, #tpu.memory_space<semaphore_mem>> -> memref<!tpu.dma_semaphore, #tpu.memory_space<semaphore_mem>>
      tpu.enqueue_dma source(%71 : memref<1x128xf32, #tpu.memory_space<any>>) target(%73 : memref<1x128xf32, #tpu.memory_space<vmem>>) target_semaphore(%75 : memref<!tpu.dma_semaphore, #tpu.memory_space<semaphore_mem>>)
      %c2_i32 = arith.constant 2 : i32
      %76 = arith.addi %59, %c2_i32 : i32
      %77 = arith.index_cast %76 : i32 to index
      %78 = memref.load %arg2[%77] : memref<16xi32, #tpu.memory_space<smem>>
      %c0_i32_40 = arith.constant 0 : i32
      %c0_i32_41 = arith.constant 0 : i32
      %c0_i32_42 = arith.constant 0 : i32
      %79 = tpu.memref_slice %arg5[%78, %c0_i32_42] : memref<64x128xf32, #tpu.memory_space<any>> -> memref<1x128xf32, #tpu.memory_space<any>>
      %c0_i32_43 = arith.constant 0 : i32
      %80 = tpu.memref_slice %arg10[%c0_i32_40, %c2_i32, %c0_i32_43] : memref<2x8x128xf32, #tpu.memory_space<vmem>> -> memref<1x1x128xf32, #tpu.memory_space<vmem>>
      %81 = tpu.memref_squeeze %80 : memref<1x1x128xf32, #tpu.memory_space<vmem>> -> memref<1x128xf32, #tpu.memory_space<vmem>>
      %82 = tpu.memref_slice %arg11[%c0_i32_41] : memref<2x!tpu.dma_semaphore, #tpu.memory_space<semaphore_mem>> -> memref<1x!tpu.dma_semaphore, #tpu.memory_space<semaphore_mem>>
      %83 = tpu.memref_squeeze %82 : memref<1x!tpu.dma_semaphore, #tpu.memory_space<semaphore_mem>> -> memref<!tpu.dma_semaphore, #tpu.memory_space<semaphore_mem>>
      tpu.enqueue_dma source(%79 : memref<1x128xf32, #tpu.memory_space<any>>) target(%81 : memref<1x128xf32, #tpu.memory_space<vmem>>) target_semaphore(%83 : memref<!tpu.dma_semaphore, #tpu.memory_space<semaphore_mem>>)
      %c3_i32 = arith.constant 3 : i32
      %84 = arith.addi %59, %c3_i32 : i32
      %85 = arith.index_cast %84 : i32 to index
      %86 = memref.load %arg2[%85] : memref<16xi32, #tpu.memory_space<smem>>
      %c0_i32_44 = arith.constant 0 : i32
      %c0_i32_45 = arith.constant 0 : i32
      %c0_i32_46 = arith.constant 0 : i32
      %87 = tpu.memref_slice %arg5[%86, %c0_i32_46] : memref<64x128xf32, #tpu.memory_space<any>> -> memref<1x128xf32, #tpu.memory_space<any>>
      %c0_i32_47 = arith.constant 0 : i32
      %88 = tpu.memref_slice %arg10[%c0_i32_44, %c3_i32, %c0_i32_47] : memref<2x8x128xf32, #tpu.memory_space<vmem>> -> memref<1x1x128xf32, #tpu.memory_space<vmem>>
      %89 = tpu.memref_squeeze %88 : memref<1x1x128xf32, #tpu.memory_space<vmem>> -> memref<1x128xf32, #tpu.memory_space<vmem>>
      %90 = tpu.memref_slice %arg11[%c0_i32_45] : memref<2x!tpu.dma_semaphore, #tpu.memory_space<semaphore_mem>> -> memref<1x!tpu.dma_semaphore, #tpu.memory_space<semaphore_mem>>
      %91 = tpu.memref_squeeze %90 : memref<1x!tpu.dma_semaphore, #tpu.memory_space<semaphore_mem>> -> memref<!tpu.dma_semaphore, #tpu.memory_space<semaphore_mem>>
      tpu.enqueue_dma source(%87 : memref<1x128xf32, #tpu.memory_space<any>>) target(%89 : memref<1x128xf32, #tpu.memory_space<vmem>>) target_semaphore(%91 : memref<!tpu.dma_semaphore, #tpu.memory_space<semaphore_mem>>)
      %c4_i32 = arith.constant 4 : i32
      %92 = arith.addi %59, %c4_i32 : i32
      %93 = arith.index_cast %92 : i32 to index
      %94 = memref.load %arg2[%93] : memref<16xi32, #tpu.memory_space<smem>>
      %c0_i32_48 = arith.constant 0 : i32
      %c0_i32_49 = arith.constant 0 : i32
      %c0_i32_50 = arith.constant 0 : i32
      %95 = tpu.memref_slice %arg5[%94, %c0_i32_50] : memref<64x128xf32, #tpu.memory_space<any>> -> memref<1x128xf32, #tpu.memory_space<any>>
      %c0_i32_51 = arith.constant 0 : i32
      %96 = tpu.memref_slice %arg10[%c0_i32_48, %c4_i32, %c0_i32_51] : memref<2x8x128xf32, #tpu.memory_space<vmem>> -> memref<1x1x128xf32, #tpu.memory_space<vmem>>
      %97 = tpu.memref_squeeze %96 : memref<1x1x128xf32, #tpu.memory_space<vmem>> -> memref<1x128xf32, #tpu.memory_space<vmem>>
      %98 = tpu.memref_slice %arg11[%c0_i32_49] : memref<2x!tpu.dma_semaphore, #tpu.memory_space<semaphore_mem>> -> memref<1x!tpu.dma_semaphore, #tpu.memory_space<semaphore_mem>>
      %99 = tpu.memref_squeeze %98 : memref<1x!tpu.dma_semaphore, #tpu.memory_space<semaphore_mem>> -> memref<!tpu.dma_semaphore, #tpu.memory_space<semaphore_mem>>
      tpu.enqueue_dma source(%95 : memref<1x128xf32, #tpu.memory_space<any>>) target(%97 : memref<1x128xf32, #tpu.memory_space<vmem>>) target_semaphore(%99 : memref<!tpu.dma_semaphore, #tpu.memory_space<semaphore_mem>>)
      %c5_i32 = arith.constant 5 : i32
      %100 = arith.addi %59, %c5_i32 : i32
      %101 = arith.index_cast %100 : i32 to index
      %102 = memref.load %arg2[%101] : memref<16xi32, #tpu.memory_space<smem>>
      %c0_i32_52 = arith.constant 0 : i32
      %c0_i32_53 = arith.constant 0 : i32
      %c0_i32_54 = arith.constant 0 : i32
      %103 = tpu.memref_slice %arg5[%102, %c0_i32_54] : memref<64x128xf32, #tpu.memory_space<any>> -> memref<1x128xf32, #tpu.memory_space<any>>
      %c0_i32_55 = arith.constant 0 : i32
      %104 = tpu.memref_slice %arg10[%c0_i32_52, %c5_i32, %c0_i32_55] : memref<2x8x128xf32, #tpu.memory_space<vmem>> -> memref<1x1x128xf32, #tpu.memory_space<vmem>>
      %105 = tpu.memref_squeeze %104 : memref<1x1x128xf32, #tpu.memory_space<vmem>> -> memref<1x128xf32, #tpu.memory_space<vmem>>
      %106 = tpu.memref_slice %arg11[%c0_i32_53] : memref<2x!tpu.dma_semaphore, #tpu.memory_space<semaphore_mem>> -> memref<1x!tpu.dma_semaphore, #tpu.memory_space<semaphore_mem>>
      %107 = tpu.memref_squeeze %106 : memref<1x!tpu.dma_semaphore, #tpu.memory_space<semaphore_mem>> -> memref<!tpu.dma_semaphore, #tpu.memory_space<semaphore_mem>>
      tpu.enqueue_dma source(%103 : memref<1x128xf32, #tpu.memory_space<any>>) target(%105 : memref<1x128xf32, #tpu.memory_space<vmem>>) target_semaphore(%107 : memref<!tpu.dma_semaphore, #tpu.memory_space<semaphore_mem>>)
      %c6_i32 = arith.constant 6 : i32
      %108 = arith.addi %59, %c6_i32 : i32
      %109 = arith.index_cast %108 : i32 to index
      %110 = memref.load %arg2[%109] : memref<16xi32, #tpu.memory_space<smem>>
      %c0_i32_56 = arith.constant 0 : i32
      %c0_i32_57 = arith.constant 0 : i32
      %c0_i32_58 = arith.constant 0 : i32
      %111 = tpu.memref_slice %arg5[%110, %c0_i32_58] : memref<64x128xf32, #tpu.memory_space<any>> -> memref<1x128xf32, #tpu.memory_space<any>>
      %c0_i32_59 = arith.constant 0 : i32
      %112 = tpu.memref_slice %arg10[%c0_i32_56, %c6_i32, %c0_i32_59] : memref<2x8x128xf32, #tpu.memory_space<vmem>> -> memref<1x1x128xf32, #tpu.memory_space<vmem>>
      %113 = tpu.memref_squeeze %112 : memref<1x1x128xf32, #tpu.memory_space<vmem>> -> memref<1x128xf32, #tpu.memory_space<vmem>>
      %114 = tpu.memref_slice %arg11[%c0_i32_57] : memref<2x!tpu.dma_semaphore, #tpu.memory_space<semaphore_mem>> -> memref<1x!tpu.dma_semaphore, #tpu.memory_space<semaphore_mem>>
      %115 = tpu.memref_squeeze %114 : memref<1x!tpu.dma_semaphore, #tpu.memory_space<semaphore_mem>> -> memref<!tpu.dma_semaphore, #tpu.memory_space<semaphore_mem>>
      tpu.enqueue_dma source(%111 : memref<1x128xf32, #tpu.memory_space<any>>) target(%113 : memref<1x128xf32, #tpu.memory_space<vmem>>) target_semaphore(%115 : memref<!tpu.dma_semaphore, #tpu.memory_space<semaphore_mem>>)
      %c7_i32 = arith.constant 7 : i32
      %116 = arith.addi %59, %c7_i32 : i32
      %117 = arith.index_cast %116 : i32 to index
      %118 = memref.load %arg2[%117] : memref<16xi32, #tpu.memory_space<smem>>
      %c0_i32_60 = arith.constant 0 : i32
      %c0_i32_61 = arith.constant 0 : i32
      %c0_i32_62 = arith.constant 0 : i32
      %119 = tpu.memref_slice %arg5[%118, %c0_i32_62] : memref<64x128xf32, #tpu.memory_space<any>> -> memref<1x128xf32, #tpu.memory_space<any>>
      %c0_i32_63 = arith.constant 0 : i32
      %120 = tpu.memref_slice %arg10[%c0_i32_60, %c7_i32, %c0_i32_63] : memref<2x8x128xf32, #tpu.memory_space<vmem>> -> memref<1x1x128xf32, #tpu.memory_space<vmem>>
      %121 = tpu.memref_squeeze %120 : memref<1x1x128xf32, #tpu.memory_space<vmem>> -> memref<1x128xf32, #tpu.memory_space<vmem>>
      %122 = tpu.memref_slice %arg11[%c0_i32_61] : memref<2x!tpu.dma_semaphore, #tpu.memory_space<semaphore_mem>> -> memref<1x!tpu.dma_semaphore, #tpu.memory_space<semaphore_mem>>
      %123 = tpu.memref_squeeze %122 : memref<1x!tpu.dma_semaphore, #tpu.memory_space<semaphore_mem>> -> memref<!tpu.dma_semaphore, #tpu.memory_space<semaphore_mem>>
      tpu.enqueue_dma source(%119 : memref<1x128xf32, #tpu.memory_space<any>>) target(%121 : memref<1x128xf32, #tpu.memory_space<vmem>>) target_semaphore(%123 : memref<!tpu.dma_semaphore, #tpu.memory_space<semaphore_mem>>)
      %c8_i32_64 = arith.constant 8 : i32
    } else {
    }
    %c1_i32 = arith.constant 1 : i32
    %3 = arith.addi %arg1, %c1_i32 : i32
    %c1_i32_1 = arith.constant 1 : i32
    %4 = arith.cmpi slt, %3, %c1_i32_1 : i32
    %5 = arith.extui %4 : i1 to i32
    %c0_i32_2 = arith.constant 0 : i32
    %6 = arith.cmpi ne, %5, %c0_i32_2 : i32
    scf.if %6 {
      %c1_i32_28 = arith.constant 1 : i32
      %57 = arith.addi %arg1, %c1_i32_28 : i32
      %c1_i32_29 = arith.constant 1 : i32
      %58 = arith.addi %arg1, %c1_i32_29 : i32
      %c1_i32_30 = arith.constant 1 : i32
      %59 = arith.andi %58, %c1_i32_30 : i32
      %c1_i32_31 = arith.constant 1 : i32
      %60 = arith.muli %arg0, %c1_i32_31 : i32
      %61 = arith.addi %60, %57 : i32
      %c8_i32 = arith.constant 8 : i32
      %62 = arith.muli %61, %c8_i32 : i32
      %c0_i32_32 = arith.constant 0 : i32
      %63 = arith.addi %62, %c0_i32_32 : i32
      %64 = arith.index_cast %63 : i32 to index
      %65 = memref.load %arg2[%64] : memref<16xi32, #tpu.memory_space<smem>>
      %c0_i32_33 = arith.constant 0 : i32
      %66 = tpu.memref_slice %arg5[%65, %c0_i32_33] : memref<64x128xf32, #tpu.memory_space<any>> -> memref<1x128xf32, #tpu.memory_space<any>>
      %c0_i32_34 = arith.constant 0 : i32
      %67 = tpu.memref_slice %arg10[%59, %c0_i32_32, %c0_i32_34] : memref<2x8x128xf32, #tpu.memory_space<vmem>> -> memref<1x1x128xf32, #tpu.memory_space<vmem>>
      %68 = tpu.memref_squeeze %67 : memref<1x1x128xf32, #tpu.memory_space<vmem>> -> memref<1x128xf32, #tpu.memory_space<vmem>>
      %69 = tpu.memref_slice %arg11[%59] : memref<2x!tpu.dma_semaphore, #tpu.memory_space<semaphore_mem>> -> memref<1x!tpu.dma_semaphore, #tpu.memory_space<semaphore_mem>>
      %70 = tpu.memref_squeeze %69 : memref<1x!tpu.dma_semaphore, #tpu.memory_space<semaphore_mem>> -> memref<!tpu.dma_semaphore, #tpu.memory_space<semaphore_mem>>
      tpu.enqueue_dma source(%66 : memref<1x128xf32, #tpu.memory_space<any>>) target(%68 : memref<1x128xf32, #tpu.memory_space<vmem>>) target_semaphore(%70 : memref<!tpu.dma_semaphore, #tpu.memory_space<semaphore_mem>>)
      %c1_i32_35 = arith.constant 1 : i32
      %71 = arith.addi %62, %c1_i32_35 : i32
      %72 = arith.index_cast %71 : i32 to index
      %73 = memref.load %arg2[%72] : memref<16xi32, #tpu.memory_space<smem>>
      %c0_i32_36 = arith.constant 0 : i32
      %74 = tpu.memref_slice %arg5[%73, %c0_i32_36] : memref<64x128xf32, #tpu.memory_space<any>> -> memref<1x128xf32, #tpu.memory_space<any>>
      %c0_i32_37 = arith.constant 0 : i32
      %75 = tpu.memref_slice %arg10[%59, %c1_i32_35, %c0_i32_37] : memref<2x8x128xf32, #tpu.memory_space<vmem>> -> memref<1x1x128xf32, #tpu.memory_space<vmem>>
      %76 = tpu.memref_squeeze %75 : memref<1x1x128xf32, #tpu.memory_space<vmem>> -> memref<1x128xf32, #tpu.memory_space<vmem>>
      %77 = tpu.memref_slice %arg11[%59] : memref<2x!tpu.dma_semaphore, #tpu.memory_space<semaphore_mem>> -> memref<1x!tpu.dma_semaphore, #tpu.memory_space<semaphore_mem>>
      %78 = tpu.memref_squeeze %77 : memref<1x!tpu.dma_semaphore, #tpu.memory_space<semaphore_mem>> -> memref<!tpu.dma_semaphore, #tpu.memory_space<semaphore_mem>>
      tpu.enqueue_dma source(%74 : memref<1x128xf32, #tpu.memory_space<any>>) target(%76 : memref<1x128xf32, #tpu.memory_space<vmem>>) target_semaphore(%78 : memref<!tpu.dma_semaphore, #tpu.memory_space<semaphore_mem>>)
      %c2_i32 = arith.constant 2 : i32
      %79 = arith.addi %62, %c2_i32 : i32
      %80 = arith.index_cast %79 : i32 to index
      %81 = memref.load %arg2[%80] : memref<16xi32, #tpu.memory_space<smem>>
      %c0_i32_38 = arith.constant 0 : i32
      %82 = tpu.memref_slice %arg5[%81, %c0_i32_38] : memref<64x128xf32, #tpu.memory_space<any>> -> memref<1x128xf32, #tpu.memory_space<any>>
      %c0_i32_39 = arith.constant 0 : i32
      %83 = tpu.memref_slice %arg10[%59, %c2_i32, %c0_i32_39] : memref<2x8x128xf32, #tpu.memory_space<vmem>> -> memref<1x1x128xf32, #tpu.memory_space<vmem>>
      %84 = tpu.memref_squeeze %83 : memref<1x1x128xf32, #tpu.memory_space<vmem>> -> memref<1x128xf32, #tpu.memory_space<vmem>>
      %85 = tpu.memref_slice %arg11[%59] : memref<2x!tpu.dma_semaphore, #tpu.memory_space<semaphore_mem>> -> memref<1x!tpu.dma_semaphore, #tpu.memory_space<semaphore_mem>>
      %86 = tpu.memref_squeeze %85 : memref<1x!tpu.dma_semaphore, #tpu.memory_space<semaphore_mem>> -> memref<!tpu.dma_semaphore, #tpu.memory_space<semaphore_mem>>
      tpu.enqueue_dma source(%82 : memref<1x128xf32, #tpu.memory_space<any>>) target(%84 : memref<1x128xf32, #tpu.memory_space<vmem>>) target_semaphore(%86 : memref<!tpu.dma_semaphore, #tpu.memory_space<semaphore_mem>>)
      %c3_i32 = arith.constant 3 : i32
      %87 = arith.addi %62, %c3_i32 : i32
      %88 = arith.index_cast %87 : i32 to index
      %89 = memref.load %arg2[%88] : memref<16xi32, #tpu.memory_space<smem>>
      %c0_i32_40 = arith.constant 0 : i32
      %90 = tpu.memref_slice %arg5[%89, %c0_i32_40] : memref<64x128xf32, #tpu.memory_space<any>> -> memref<1x128xf32, #tpu.memory_space<any>>
      %c0_i32_41 = arith.constant 0 : i32
      %91 = tpu.memref_slice %arg10[%59, %c3_i32, %c0_i32_41] : memref<2x8x128xf32, #tpu.memory_space<vmem>> -> memref<1x1x128xf32, #tpu.memory_space<vmem>>
      %92 = tpu.memref_squeeze %91 : memref<1x1x128xf32, #tpu.memory_space<vmem>> -> memref<1x128xf32, #tpu.memory_space<vmem>>
      %93 = tpu.memref_slice %arg11[%59] : memref<2x!tpu.dma_semaphore, #tpu.memory_space<semaphore_mem>> -> memref<1x!tpu.dma_semaphore, #tpu.memory_space<semaphore_mem>>
      %94 = tpu.memref_squeeze %93 : memref<1x!tpu.dma_semaphore, #tpu.memory_space<semaphore_mem>> -> memref<!tpu.dma_semaphore, #tpu.memory_space<semaphore_mem>>
      tpu.enqueue_dma source(%90 : memref<1x128xf32, #tpu.memory_space<any>>) target(%92 : memref<1x128xf32, #tpu.memory_space<vmem>>) target_semaphore(%94 : memref<!tpu.dma_semaphore, #tpu.memory_space<semaphore_mem>>)
      %c4_i32 = arith.constant 4 : i32
      %95 = arith.addi %62, %c4_i32 : i32
      %96 = arith.index_cast %95 : i32 to index
      %97 = memref.load %arg2[%96] : memref<16xi32, #tpu.memory_space<smem>>
      %c0_i32_42 = arith.constant 0 : i32
      %98 = tpu.memref_slice %arg5[%97, %c0_i32_42] : memref<64x128xf32, #tpu.memory_space<any>> -> memref<1x128xf32, #tpu.memory_space<any>>
      %c0_i32_43 = arith.constant 0 : i32
      %99 = tpu.memref_slice %arg10[%59, %c4_i32, %c0_i32_43] : memref<2x8x128xf32, #tpu.memory_space<vmem>> -> memref<1x1x128xf32, #tpu.memory_space<vmem>>
      %100 = tpu.memref_squeeze %99 : memref<1x1x128xf32, #tpu.memory_space<vmem>> -> memref<1x128xf32, #tpu.memory_space<vmem>>
      %101 = tpu.memref_slice %arg11[%59] : memref<2x!tpu.dma_semaphore, #tpu.memory_space<semaphore_mem>> -> memref<1x!tpu.dma_semaphore, #tpu.memory_space<semaphore_mem>>
      %102 = tpu.memref_squeeze %101 : memref<1x!tpu.dma_semaphore, #tpu.memory_space<semaphore_mem>> -> memref<!tpu.dma_semaphore, #tpu.memory_space<semaphore_mem>>
      tpu.enqueue_dma source(%98 : memref<1x128xf32, #tpu.memory_space<any>>) target(%100 : memref<1x128xf32, #tpu.memory_space<vmem>>) target_semaphore(%102 : memref<!tpu.dma_semaphore, #tpu.memory_space<semaphore_mem>>)
      %c5_i32 = arith.constant 5 : i32
      %103 = arith.addi %62, %c5_i32 : i32
      %104 = arith.index_cast %103 : i32 to index
      %105 = memref.load %arg2[%104] : memref<16xi32, #tpu.memory_space<smem>>
      %c0_i32_44 = arith.constant 0 : i32
      %106 = tpu.memref_slice %arg5[%105, %c0_i32_44] : memref<64x128xf32, #tpu.memory_space<any>> -> memref<1x128xf32, #tpu.memory_space<any>>
      %c0_i32_45 = arith.constant 0 : i32
      %107 = tpu.memref_slice %arg10[%59, %c5_i32, %c0_i32_45] : memref<2x8x128xf32, #tpu.memory_space<vmem>> -> memref<1x1x128xf32, #tpu.memory_space<vmem>>
      %108 = tpu.memref_squeeze %107 : memref<1x1x128xf32, #tpu.memory_space<vmem>> -> memref<1x128xf32, #tpu.memory_space<vmem>>
      %109 = tpu.memref_slice %arg11[%59] : memref<2x!tpu.dma_semaphore, #tpu.memory_space<semaphore_mem>> -> memref<1x!tpu.dma_semaphore, #tpu.memory_space<semaphore_mem>>
      %110 = tpu.memref_squeeze %109 : memref<1x!tpu.dma_semaphore, #tpu.memory_space<semaphore_mem>> -> memref<!tpu.dma_semaphore, #tpu.memory_space<semaphore_mem>>
      tpu.enqueue_dma source(%106 : memref<1x128xf32, #tpu.memory_space<any>>) target(%108 : memref<1x128xf32, #tpu.memory_space<vmem>>) target_semaphore(%110 : memref<!tpu.dma_semaphore, #tpu.memory_space<semaphore_mem>>)
      %c6_i32 = arith.constant 6 : i32
      %111 = arith.addi %62, %c6_i32 : i32
      %112 = arith.index_cast %111 : i32 to index
      %113 = memref.load %arg2[%112] : memref<16xi32, #tpu.memory_space<smem>>
      %c0_i32_46 = arith.constant 0 : i32
      %114 = tpu.memref_slice %arg5[%113, %c0_i32_46] : memref<64x128xf32, #tpu.memory_space<any>> -> memref<1x128xf32, #tpu.memory_space<any>>
      %c0_i32_47 = arith.constant 0 : i32
      %115 = tpu.memref_slice %arg10[%59, %c6_i32, %c0_i32_47] : memref<2x8x128xf32, #tpu.memory_space<vmem>> -> memref<1x1x128xf32, #tpu.memory_space<vmem>>
      %116 = tpu.memref_squeeze %115 : memref<1x1x128xf32, #tpu.memory_space<vmem>> -> memref<1x128xf32, #tpu.memory_space<vmem>>
      %117 = tpu.memref_slice %arg11[%59] : memref<2x!tpu.dma_semaphore, #tpu.memory_space<semaphore_mem>> -> memref<1x!tpu.dma_semaphore, #tpu.memory_space<semaphore_mem>>
      %118 = tpu.memref_squeeze %117 : memref<1x!tpu.dma_semaphore, #tpu.memory_space<semaphore_mem>> -> memref<!tpu.dma_semaphore, #tpu.memory_space<semaphore_mem>>
      tpu.enqueue_dma source(%114 : memref<1x128xf32, #tpu.memory_space<any>>) target(%116 : memref<1x128xf32, #tpu.memory_space<vmem>>) target_semaphore(%118 : memref<!tpu.dma_semaphore, #tpu.memory_space<semaphore_mem>>)
      %c7_i32 = arith.constant 7 : i32
      %119 = arith.addi %62, %c7_i32 : i32
      %120 = arith.index_cast %119 : i32 to index
      %121 = memref.load %arg2[%120] : memref<16xi32, #tpu.memory_space<smem>>
      %c0_i32_48 = arith.constant 0 : i32
      %122 = tpu.memref_slice %arg5[%121, %c0_i32_48] : memref<64x128xf32, #tpu.memory_space<any>> -> memref<1x128xf32, #tpu.memory_space<any>>
      %c0_i32_49 = arith.constant 0 : i32
      %123 = tpu.memref_slice %arg10[%59, %c7_i32, %c0_i32_49] : memref<2x8x128xf32, #tpu.memory_space<vmem>> -> memref<1x1x128xf32, #tpu.memory_space<vmem>>
      %124 = tpu.memref_squeeze %123 : memref<1x1x128xf32, #tpu.memory_space<vmem>> -> memref<1x128xf32, #tpu.memory_space<vmem>>
      %125 = tpu.memref_slice %arg11[%59] : memref<2x!tpu.dma_semaphore, #tpu.memory_space<semaphore_mem>> -> memref<1x!tpu.dma_semaphore, #tpu.memory_space<semaphore_mem>>
      %126 = tpu.memref_squeeze %125 : memref<1x!tpu.dma_semaphore, #tpu.memory_space<semaphore_mem>> -> memref<!tpu.dma_semaphore, #tpu.memory_space<semaphore_mem>>
      tpu.enqueue_dma source(%122 : memref<1x128xf32, #tpu.memory_space<any>>) target(%124 : memref<1x128xf32, #tpu.memory_space<vmem>>) target_semaphore(%126 : memref<!tpu.dma_semaphore, #tpu.memory_space<semaphore_mem>>)
      %c8_i32_50 = arith.constant 8 : i32
    } else {
    }
    %c0 = arith.constant 0 : index
    %c0_3 = arith.constant 0 : index
    %c0_4 = arith.constant 0 : index
    %7 = vector.load %arg3[%c0, %c0_3, %c0_4] : memref<1x8x1xf32, #tpu.memory_space<vmem>>, vector<1x8x1xf32>
    %8 = vector.shape_cast %7 : vector<1x8x1xf32> to vector<8x1xf32>
    %c0_5 = arith.constant 0 : index
    %c0_6 = arith.constant 0 : index
    %9 = vector.load %arg6[%c0_5, %c0_6] : memref<2x128xf32, #tpu.memory_space<vmem>>, vector<1x128xf32>
    %c1 = arith.constant 1 : index
    %c0_7 = arith.constant 0 : index
    %10 = vector.load %arg6[%c1, %c0_7] : memref<2x128xf32, #tpu.memory_space<vmem>>, vector<1x128xf32>
    %11 = arith.subf %10, %9 : vector<1x128xf32>
    %12 = vector.broadcast %8 : vector<8x1xf32> to vector<8x128xf32>
    %13 = vector.broadcast %11 : vector<1x128xf32> to vector<8x128xf32>
    %14 = arith.mulf %12, %13 : vector<8x128xf32>
    %15 = vector.broadcast %9 : vector<1x128xf32> to vector<8x128xf32>
    %16 = arith.addf %15, %14 : vector<8x128xf32>
    %c0_8 = arith.constant 0 : index
    %c0_9 = arith.constant 0 : index
    %17 = vector.load %arg4[%c0_8, %c0_9] : memref<8x128xf32, #tpu.memory_space<vmem>>, vector<8x128xf32>
    %c0_10 = arith.constant 0 : index
    %c0_11 = arith.constant 0 : index
    %18 = vector.load %arg7[%c0_10, %c0_11] : memref<1x128xf32, #tpu.memory_space<vmem>>, vector<1x128xf32>
    %c0_12 = arith.constant 0 : index
    %c0_13 = arith.constant 0 : index
    %19 = vector.load %arg8[%c0_12, %c0_13] : memref<1x128xf32, #tpu.memory_space<vmem>>, vector<1x128xf32>
    %c1_i32_14 = arith.constant 1 : i32
    %20 = arith.andi %arg1, %c1_i32_14 : i32
    %c0_i32_15 = arith.constant 0 : i32
    %c0_i32_16 = arith.constant 0 : i32
    %21 = tpu.memref_slice %arg10[%20, %c0_i32_15, %c0_i32_16] : memref<2x8x128xf32, #tpu.memory_space<vmem>> -> memref<1x8x128xf32, #tpu.memory_space<vmem>>
    %22 = tpu.memref_squeeze %21 : memref<1x8x128xf32, #tpu.memory_space<vmem>> -> memref<8x128xf32, #tpu.memory_space<vmem>>
    %c0_i32_17 = arith.constant 0 : i32
    %c0_i32_18 = arith.constant 0 : i32
    %23 = tpu.memref_slice %arg10[%20, %c0_i32_17, %c0_i32_18] : memref<2x8x128xf32, #tpu.memory_space<vmem>> -> memref<1x8x128xf32, #tpu.memory_space<vmem>>
    %24 = tpu.memref_squeeze %23 : memref<1x8x128xf32, #tpu.memory_space<vmem>> -> memref<8x128xf32, #tpu.memory_space<vmem>>
    %25 = tpu.memref_slice %arg11[%20] : memref<2x!tpu.dma_semaphore, #tpu.memory_space<semaphore_mem>> -> memref<1x!tpu.dma_semaphore, #tpu.memory_space<semaphore_mem>>
    %26 = tpu.memref_squeeze %25 : memref<1x!tpu.dma_semaphore, #tpu.memory_space<semaphore_mem>> -> memref<!tpu.dma_semaphore, #tpu.memory_space<semaphore_mem>>
    tpu.wait_dma2 semaphore(%26 : memref<!tpu.dma_semaphore, #tpu.memory_space<semaphore_mem>>) src(%22 : memref<8x128xf32, #tpu.memory_space<vmem>>) dst(%24 : memref<8x128xf32, #tpu.memory_space<vmem>>)
    %27 = arith.index_cast %20 : i32 to index
    %c0_19 = arith.constant 0 : index
    %c0_20 = arith.constant 0 : index
    %28 = vector.load %arg10[%27, %c0_19, %c0_20] : memref<2x8x128xf32, #tpu.memory_space<vmem>>, vector<1x8x128xf32>
    %29 = vector.shape_cast %28 : vector<1x8x128xf32> to vector<8x128xf32>
    %30 = arith.addf %29, %17 : vector<8x128xf32>
    %31 = arith.addf %30, %16 : vector<8x128xf32>
    %cst = arith.constant dense<0.000000e+00> : vector<8xf32>
    %32 = vector.multi_reduction <add>, %31, %cst [1] : vector<8x128xf32> to vector<8xf32>
    %33 = vector.shape_cast %32 : vector<8xf32> to vector<8x1xf32>
    %cst_21 = arith.constant 1.280000e+02 : f32
    %34 = vector.broadcast %cst_21 : f32 to vector<8x1xf32>
    %35 = arith.divf %33, %34 : vector<8x1xf32>
    %36 = vector.broadcast %35 : vector<8x1xf32> to vector<8x128xf32>
    %37 = arith.subf %31, %36 : vector<8x128xf32>
    %38 = arith.mulf %37, %37 : vector<8x128xf32>
    %cst_22 = arith.constant dense<0.000000e+00> : vector<8xf32>
    %39 = vector.multi_reduction <add>, %38, %cst_22 [1] : vector<8x128xf32> to vector<8xf32>
    %40 = vector.shape_cast %39 : vector<8xf32> to vector<8x1xf32>
    %cst_23 = arith.constant 1.280000e+02 : f32
    %41 = vector.broadcast %cst_23 : f32 to vector<8x1xf32>
    %42 = arith.divf %40, %41 : vector<8x1xf32>
    %43 = vector.broadcast %35 : vector<8x1xf32> to vector<8x128xf32>
    %44 = arith.subf %31, %43 : vector<8x128xf32>
    %cst_24 = arith.constant 9.99999996E-13 : f32
    %45 = vector.broadcast %cst_24 : f32 to vector<8x1xf32>
    %46 = arith.addf %42, %45 : vector<8x1xf32>
    %47 = math.rsqrt %46 : vector<8x1xf32>
    %48 = vector.broadcast %47 : vector<8x1xf32> to vector<8x128xf32>
    %49 = arith.mulf %44, %48 : vector<8x128xf32>
    %50 = vector.broadcast %18 : vector<1x128xf32> to vector<8x128xf32>
    %51 = arith.mulf %49, %50 : vector<8x128xf32>
    %52 = vector.broadcast %19 : vector<1x128xf32> to vector<8x128xf32>
    %53 = arith.addf %51, %52 : vector<8x128xf32>
    %c0_25 = arith.constant 0 : index
    %c0_26 = arith.constant 0 : index
    %c0_27 = arith.constant 0 : index
    %54 = vector.load %arg9[%c0_25, %c0_26, %c0_27] : memref<1x8x128xf32, #tpu.memory_space<vmem>>, vector<1x8x128xf32>
    %55 = vector.shape_cast %54 : vector<1x8x128xf32> to vector<8x128xf32>
    %56 = vector.shape_cast %53 : vector<8x128xf32> to vector<1x8x128xf32>
    tpu.vector_store %arg9[%c0_25, %c0_26, %c0_27], %56 {strides = array<i32>} : memref<1x8x128xf32, #tpu.memory_space<vmem>>, vector<1x8x128xf32>,
    return
  }
  func.func @transform_0(%arg0: i32, %arg1: i32, %arg2: memref<16xi32, #tpu.memory_space<smem>>) -> (i32, i32, i32) {
    %c0_i32 = arith.constant 0 : i32
    %c0_i32_0 = arith.constant 0 : i32
    return %arg0, %arg1, %c0_i32 : i32, i32, i32
  }
  func.func @transform_1(%arg0: i32, %arg1: i32, %arg2: memref<16xi32, #tpu.memory_space<smem>>) -> (i32, i32) {
    %c0_i32 = arith.constant 0 : i32
    %c0_i32_0 = arith.constant 0 : i32
    return %arg1, %c0_i32 : i32, i32
  }
  func.func @transform_3(%arg0: i32, %arg1: i32, %arg2: memref<16xi32, #tpu.memory_space<smem>>) -> (i32, i32) {
    %c0_i32 = arith.constant 0 : i32
    %c0_i32_0 = arith.constant 0 : i32
    %c0_i32_1 = arith.constant 0 : i32
    return %c0_i32, %c0_i32_0 : i32, i32
  }
  func.func @transform_4(%arg0: i32, %arg1: i32, %arg2: memref<16xi32, #tpu.memory_space<smem>>) -> (i32, i32) {
    %c0_i32 = arith.constant 0 : i32
    %c0_i32_0 = arith.constant 0 : i32
    %c0_i32_1 = arith.constant 0 : i32
    return %c0_i32, %c0_i32_0 : i32, i32
  }
  func.func @transform_5(%arg0: i32, %arg1: i32, %arg2: memref<16xi32, #tpu.memory_space<smem>>) -> (i32, i32) {
    %c0_i32 = arith.constant 0 : i32
    %c0_i32_0 = arith.constant 0 : i32
    %c0_i32_1 = arith.constant 0 : i32
    return %c0_i32, %c0_i32_0 : i32, i32
  }
  func.func @transform_6(%arg0: i32, %arg1: i32, %arg2: memref<16xi32, #tpu.memory_space<smem>>) -> (i32, i32, i32) {
    %c0_i32 = arith.constant 0 : i32
    %c0_i32_0 = arith.constant 0 : i32
    return %arg0, %arg1, %c0_i32 : i32, i32, i32
  }
}

</mosaic_0001>

<llo_original>
// kernel: tpu_custom_call.1
$region0: #{tpu_custom_call.1}
  #allocation0 [shape = 'u32[]', space=smem, size = 0x4, offset = 0x4, fixed_abs, tag = 'smem constant byte address 0x4 - core index']
  #allocation1 [shape = 'u32[72,128]{1,0:T(1,128)}', space=vmem, size = 0x9000, scoped, tag = 'internal scratch']
  #allocation2 [shape = 'f32[2,8,128]{2,1,0:T(8,128)}', space=vmem, size = 0x2000, scoped, tag = 'scratch operand']
  #allocation3 [shape = 's32[2]{0}', space=sflag, size = 0x8, scoped, tag = 'scratch operand']
  #allocation4 [shape = 's32[1]{0}', space=sflag, size = 0x4, scoped, tag = 'scoped memory for tpu_custom_call.1']
  #allocation5 [shape = 'u8[512]{0}', space=smem, size = 0x200, scoped, tag = 'prefetched SMEM operand 0']
  #allocation10 [shape = 's32[]', space=sflag, size = 0x4, offset = 0, fixed_abs, tag = 'sflag constant byte address 0x0 - dummy sync flag']
  #allocation11 [shape = 's32[]', space=sflag, size = 0x4, offset = 0, fixed_abs, tag = 'sflag constant byte address 0x0 - dummy sync flag']
  #allocation12 [shape = 'u32[]', space=smem, size = 0x4, offset = 0x44, fixed_abs, tag = 'smem constant byte address 0x44 - assertion arg 0']
  #allocation13 [shape = 'u32[]', space=smem, size = 0x4, offset = 0x48, fixed_abs, tag = 'smem constant byte address 0x48 - assertion arg 1']
  #allocation14 [shape = 's32[]', space=sflag, size = 0x4, offset = 0, fixed_abs, tag = 'sflag constant byte address 0x0 - dummy sync flag']
  #allocation15 [shape = 's32[]', space=sflag, size = 0x4, offset = 0, fixed_abs, tag = 'sflag constant byte address 0x0 - dummy sync flag']
  #allocation16 [shape = 's32[]', space=sflag, size = 0x4, offset = 0, fixed_abs, tag = 'sflag constant byte address 0x0 - dummy sync flag']
  #allocation17 [shape = 's32[]', space=sflag, size = 0x4, offset = 0, fixed_abs, tag = 'sflag constant byte address 0x0 - dummy sync flag']
  #allocation18 [shape = 's32[]', space=sflag, size = 0x4, offset = 0, fixed_abs, tag = 'sflag constant byte address 0x0 - dummy sync flag']
  #allocation19 [shape = 's32[]', space=sflag, size = 0x4, offset = 0, fixed_abs, tag = 'sflag constant byte address 0x0 - dummy sync flag']
  #allocation20 [shape = 's32[]', space=sflag, size = 0x4, offset = 0, fixed_abs, tag = 'sflag constant byte address 0x0 - dummy sync flag']
  #allocation21 [shape = 's32[]', space=sflag, size = 0x4, offset = 0, fixed_abs, tag = 'sflag constant byte address 0x0 - dummy sync flag']
  #allocation22 [shape = 's32[]', space=sflag, size = 0x4, offset = 0, fixed_abs, tag = 'sflag constant byte address 0x0 - dummy sync flag']
  #allocation23 [shape = 's32[]', space=sflag, size = 0x4, offset = 0, fixed_abs, tag = 'sflag constant byte address 0x0 - dummy sync flag']
  #allocation24 [shape = 's32[]', space=sflag, size = 0x4, offset = 0, fixed_abs, tag = 'sflag constant byte address 0x0 - dummy sync flag']
  #allocation25 [shape = 's32[]', space=sflag, size = 0x4, offset = 0, fixed_abs, tag = 'sflag constant byte address 0x0 - dummy sync flag']
  #allocation26 [shape = 's32[]', space=sflag, size = 0x4, offset = 0, fixed_abs, tag = 'sflag constant byte address 0x0 - dummy sync flag']
  #allocation27 [shape = 's32[]', space=sflag, size = 0x4, offset = 0, fixed_abs, tag = 'sflag constant byte address 0x0 - dummy sync flag']
  #allocation28 [shape = 's32[]', space=sflag, size = 0x4, offset = 0, fixed_abs, tag = 'sflag constant byte address 0x0 - dummy sync flag']
  #allocation29 [shape = 's32[]', space=sflag, size = 0x4, offset = 0, fixed_abs, tag = 'sflag constant byte address 0x0 - dummy sync flag']
  #allocation30 [shape = 's32[]', space=sflag, size = 0x4, offset = 0, fixed_abs, tag = 'sflag constant byte address 0x0 - dummy sync flag']
  #allocation31 [shape = 's32[]', space=sflag, size = 0x4, offset = 0, fixed_abs, tag = 'sflag constant byte address 0x0 - dummy sync flag']
  #allocation32 [shape = 's32[]', space=sflag, size = 0x4, offset = 0, fixed_abs, tag = 'sflag constant byte address 0x0 - dummy sync flag']
  #allocation33 [shape = 's32[]', space=sflag, size = 0x4, offset = 0, fixed_abs, tag = 'sflag constant byte address 0x0 - dummy sync flag']
  #allocation34 [shape = 's32[]', space=sflag, size = 0x4, offset = 0, fixed_abs, tag = 'sflag constant byte address 0x0 - dummy sync flag']
  #allocation35 [shape = 's32[]', space=sflag, size = 0x4, offset = 0, fixed_abs, tag = 'sflag constant byte address 0x0 - dummy sync flag']
  #allocation36 [shape = 's32[]', space=sflag, size = 0x4, offset = 0, fixed_abs, tag = 'sflag constant byte address 0x0 - dummy sync flag']
  #allocation37 [shape = 's32[]', space=sflag, size = 0x4, offset = 0, fixed_abs, tag = 'sflag constant byte address 0x0 - dummy sync flag']
  #allocation38 [shape = 's32[]', space=sflag, size = 0x4, offset = 0, fixed_abs, tag = 'sflag constant byte address 0x0 - dummy sync flag']
  #allocation39 [shape = 's32[]', space=sflag, size = 0x4, offset = 0, fixed_abs, tag = 'sflag constant byte address 0x0 - dummy sync flag']
  #allocation40 [shape = 's32[]', space=sflag, size = 0x4, offset = 0, fixed_abs, tag = 'sflag constant byte address 0x0 - dummy sync flag']
  #allocation41 [shape = 's32[]', space=sflag, size = 0x4, offset = 0, fixed_abs, tag = 'sflag constant byte address 0x0 - dummy sync flag']
  #allocation42 [shape = 's32[]', space=sflag, size = 0x4, offset = 0, fixed_abs, tag = 'sflag constant byte address 0x0 - dummy sync flag']
  #allocation43 [shape = 's32[]', space=sflag, size = 0x4, offset = 0, fixed_abs, tag = 'sflag constant byte address 0x0 - dummy sync flag']
  %s0 = inlined_call_operand.vmem [shape: s32[16], index: 0, kind: input, shape index: {}]
  %s1 = inlined_call_operand.vmem [shape: f32[2,8,1], index: 1, kind: input, shape index: {}]
  %s2 = inlined_call_operand.hbm [shape: f32[32,128], index: 2, kind: input, shape index: {}]
  %s3 = inlined_call_operand.hbm [shape: f32[64,128], index: 3, kind: input, shape index: {}]
  %s4 = inlined_call_operand.vmem [shape: f32[2,128], index: 4, kind: input, shape index: {}]
  %s5 = inlined_call_operand.vmem [shape: f32[1,128], index: 5, kind: input, shape index: {}]
  %s6 = inlined_call_operand.vmem [shape: f32[1,128], index: 6, kind: input, shape index: {}]
  %s7 = inlined_call_operand.hbm [shape: f32[2,8,128], index: 7, kind: output, shape index: {}]
  %s8 = sld [smem:[#allocation0]]
  $region129: #{tpu_custom_call.1} parent=0
    _
  %s10 = ssub.s32 1, %s8
  %s11 = scalar_select 0, %s10, %s8
  %s13 = sshll.u32 %s0, 4
  %s14 = int_to_ptr.vmem [resolvable:$true] %s13
  %16 = dma.vmem_to_smem %s14, 16, [#allocation5], [#allocation4]
  %18 = dma.done [#allocation4], 16
  %19 = sfence
  $region1: #{tpu_custom_call.1} parent=0
    #allocation6 [shape = 'u8[4096]{0}', space=vmem, size = 0x1000, scoped, tag = 'input window, operand 2, single buffered']
    #allocation7 [shape = 's32[2]{0}', space=sflag, size = 0x8, scoped, tag = 'scoped memory for tpu_custom_call.1']
    #allocation8 [shape = 's32[2]{0}', space=sflag, size = 0x8, scoped, tag = 'scoped memory for tpu_custom_call.1']
    #allocation9 [shape = 'u8[8192]{0}', space=vmem, size = 0x2000, scoped, tag = 'output window, operand 0']
    %20 = vsyncpa [#allocation7], 0
    %21 = vsyncpa [#allocation8], 0
    %s22 = scalar_lea.sflag [#allocation8], 1
    %23 = vsyncpa %s22, 0
    loop: start=0, step=1, limit=4
    $region2: #{tpu_custom_call.1} parent=1 // loop_pre_header
      _
    $region3: #{tpu_custom_call.1} parent=1 // loop_header
      %s25 = sphi 0, %s29
      %p26 = scmp.ge.s32.totalorder %s25, 4
      %s32 = sphi 0, %s44
      %s33 = sphi 0, %s40
      %s34 = sphi 0, %s32
      %s35 = sphi 0, %s33
      %s36 = sphi 0, %s34
      %s37 = sphi 0, %s35
      %s49 = sphi 0, %s51
      %s52 = sphi 0, %s49
      %s53 = sphi 0, %s52
      %s69 = sphi 0, %s53
      %s75 = sphi 0, %s77
      %s78 = sphi 0, %s75
      %s79 = sphi 0, %s78
      %s95 = sphi 0, %s79
      %s99 = sphi 0, %s99
      %s101 = sphi 0, %s99
      %s102 = sphi 0, %s101
      %s116 = sphi 0, %s102
      %s120 = sphi 0, %s120
      %s122 = sphi 0, %s120
      %s123 = sphi 0, %s122
      %s137 = sphi 0, %s123
      %s141 = sphi 0, %s141
      %s143 = sphi 0, %s141
      %s144 = sphi 0, %s143
      %s158 = sphi 0, %s144
      %s166 = sphi 0, %s168
      %s169 = sphi 0, %s166
      %s170 = sphi 0, %s169
      %s186 = sphi 0, %s170
    $region4: #{tpu_custom_call.1} parent=1 // loop_header_branch
      %28 = sbr.rel (%p26) target = $region8
    $region5: #{tpu_custom_call.1} parent=1 // loop_body
      %s30 = ssub.s32 %s25, 1
      %s31 = ssub.s32 %s25, 2
      %s38 = sadd.s32 1, %s33
      %p39 = scmp.ge.s32.totalorder %s38, 1
      %s40 = scalar_select %p39, 0, %s38
      %s41 = sadd.s32 1, %s32
      %s42 = scalar_select %p39, %s41, %s32
      %p43 = scmp.ge.s32.totalorder %s42, 2
      %s44 = scalar_select %p43, 0, %s42
      %s45 = ssub.s32 %s32, %s44
      %s46 = ssub.s32 %s33, %s40
      %s47 = sor.u32 %s45, %s46
      %p48 = scmp.eq.s32.totalorder %s47, 0
      %s50 = sadd.s32 %s49, 1
      %s51 = scalar_select %p48, %s49, %s50
      %p54 = pneg %p48
      %p55 = scmp.eq.s32.totalorder %s25, 1
      %p56 = por %p54, %p55
      %p57 = scmp.ne.s32.totalorder %s49, %s52
      %p58 = scmp.eq.s32.totalorder %s25, 0
      %p59 = por %p57, %p58
      %p60 = scmp.ne.s32.totalorder %s49, %s52
      %p61 = scmp.eq.s32.totalorder %s30, 1
      %p62 = por %p60, %p61
      %p63 = scmp.ne.s32.totalorder %s52, %s53
      %p64 = scmp.eq.s32.totalorder %s30, 0
      %p65 = por %p63, %p64
      %p66 = scmp.ne.s32.totalorder %s52, %s53
      %p67 = scmp.eq.s32.totalorder %s31, 1
      %p68 = por %p66, %p67
      %p70 = scmp.ne.s32.totalorder %s53, %s69
      %p71 = scmp.eq.s32.totalorder %s31, 0
      %p72 = por %p70, %p71
      %s73 = ssub.s32 %s33, %s40
      %p74 = scmp.eq.s32.totalorder %s73, 0
      %s76 = sadd.s32 %s75, 1
      %s77 = scalar_select %p74, %s75, %s76
      %p80 = pneg %p74
      %p81 = scmp.eq.s32.totalorder %s25, 1
      %p82 = por %p80, %p81
      %p83 = scmp.ne.s32.totalorder %s75, %s78
      %p84 = scmp.eq.s32.totalorder %s25, 0
      %p85 = por %p83, %p84
      %p86 = scmp.ne.s32.totalorder %s75, %s78
      %p87 = scmp.eq.s32.totalorder %s30, 1
      %p88 = por %p86, %p87
      %p89 = scmp.ne.s32.totalorder %s78, %s79
      %p90 = scmp.eq.s32.totalorder %s30, 0
      %p91 = por %p89, %p90
      %p92 = scmp.ne.s32.totalorder %s78, %s79
      %p93 = scmp.eq.s32.totalorder %s31, 1
      %p94 = por %p92, %p93
      %p96 = scmp.ne.s32.totalorder %s79, %s95
      %p97 = scmp.eq.s32.totalorder %s31, 0
      %p98 = por %p96, %p97
      %s100 = sadd.s32 %s99, 1
      %p103 = scmp.eq.s32.totalorder %s25, 1
      %p104 = scmp.ne.s32.totalorder %s99, %s101
      %p105 = scmp.eq.s32.totalorder %s25, 0
      %p106 = por %p104, %p105
      %p107 = scmp.ne.s32.totalorder %s99, %s101
      %p108 = scmp.eq.s32.totalorder %s30, 1
      %p109 = por %p107, %p108
      %p110 = scmp.ne.s32.totalorder %s101, %s102
      %p111 = scmp.eq.s32.totalorder %s30, 0
      %p112 = por %p110, %p111
      %p113 = scmp.ne.s32.totalorder %s101, %s102
      %p114 = scmp.eq.s32.totalorder %s31, 1
      %p115 = por %p113, %p114
      %p117 = scmp.ne.s32.totalorder %s102, %s116
      %p118 = scmp.eq.s32.totalorder %s31, 0
      %p119 = por %p117, %p118
      %s121 = sadd.s32 %s120, 1
      %p124 = scmp.eq.s32.totalorder %s25, 1
      %p125 = scmp.ne.s32.totalorder %s120, %s122
      %p126 = scmp.eq.s32.totalorder %s25, 0
      %p127 = por %p125, %p126
      %p128 = scmp.ne.s32.totalorder %s120, %s122
      %p129 = scmp.eq.s32.totalorder %s30, 1
      %p130 = por %p128, %p129
      %p131 = scmp.ne.s32.totalorder %s122, %s123
      %p132 = scmp.eq.s32.totalorder %s30, 0
      %p133 = por %p131, %p132
      %p134 = scmp.ne.s32.totalorder %s122, %s123
      %p135 = scmp.eq.s32.totalorder %s31, 1
      %p136 = por %p134, %p135
      %p138 = scmp.ne.s32.totalorder %s123, %s137
      %p139 = scmp.eq.s32.totalorder %s31, 0
      %p140 = por %p138, %p139
      %s142 = sadd.s32 %s141, 1
      %p145 = scmp.eq.s32.totalorder %s25, 1
      %p146 = scmp.ne.s32.totalorder %s141, %s143
      %p147 = scmp.eq.s32.totalorder %s25, 0
      %p148 = por %p146, %p147
      %p149 = scmp.ne.s32.totalorder %s141, %s143
      %p150 = scmp.eq.s32.totalorder %s30, 1
      %p151 = por %p149, %p150
      %p152 = scmp.ne.s32.totalorder %s143, %s144
      %p153 = scmp.eq.s32.totalorder %s30, 0
      %p154 = por %p152, %p153
      %p155 = scmp.ne.s32.totalorder %s143, %s144
      %p156 = scmp.eq.s32.totalorder %s31, 1
      %p157 = por %p155, %p156
      %p159 = scmp.ne.s32.totalorder %s144, %s158
      %p160 = scmp.eq.s32.totalorder %s31, 0
      %p161 = por %p159, %p160
      %s162 = ssub.s32 %s32, %s44
      %s163 = ssub.s32 %s33, %s40
      %s164 = sor.u32 %s162, %s163
      %p165 = scmp.eq.s32.totalorder %s164, 0
      %s167 = sadd.s32 %s166, 1
      %s168 = scalar_select %p165, %s166, %s167
      %p171 = pneg %p165
      %p172 = scmp.eq.s32.totalorder %s25, 1
      %p173 = por %p171, %p172
      %p174 = scmp.ne.s32.totalorder %s166, %s169
      %p175 = scmp.eq.s32.totalorder %s25, 0
      %p176 = por %p174, %p175
      %p177 = scmp.ne.s32.totalorder %s166, %s169
      %p178 = scmp.eq.s32.totalorder %s30, 1
      %p179 = por %p177, %p178
      %p180 = scmp.ne.s32.totalorder %s169, %s170
      %p181 = scmp.eq.s32.totalorder %s30, 0
      %p182 = por %p180, %p181
      %p183 = scmp.ne.s32.totalorder %s169, %s170
      %p184 = scmp.eq.s32.totalorder %s31, 1
      %p185 = por %p183, %p184
      %p187 = scmp.ne.s32.totalorder %s170, %s186
      %p188 = scmp.eq.s32.totalorder %s31, 0
      %p189 = por %p187, %p188
      %p190 = scmp.le.s32.totalorder 1, %s25
      %p191 = scmp.lt.s32.totalorder %s25, 3
      %p192 = pnand %p190, %p191
      %p193 = pneg %p192
      // Predicated region
      $region9: #{tpu_custom_call.1} parent=5 // pred_check
        _
      $region10: #{tpu_custom_call.1} parent=5 // pred_check_branch
        %195 = sbr.rel (%p192) target = $region12
      $region11: #{tpu_custom_call.1} parent=5 // pred_region
        %s196 = ssub.s32 %s25, 1
        // Predicated region
        $region13: #{tpu_custom_call.1} parent=11 // pred_check
          %p197 = pneg %p91
        $region14: #{tpu_custom_call.1} parent=11 // pred_check_branch
          %199 = sbr.rel (%p197) target = $region16
        $region15: #{tpu_custom_call.1} parent=11 // pred_region
          %201 = vsyncadd [#allocation7], 0
          %s202 = smul.addr %s35, 8
          %s203 = scalar_lea.hbm %s2, %s202
          %s205 = sshll.u32 %s203, 4
          %s206 = int_to_ptr.hbm [resolvable:$true] %s205
          %s207 = sshll.u32 [#allocation6], 4
          %s208 = int_to_ptr.vmem [resolvable:$true] %s207
          %210 = dma.hbm_to_vmem [thread:$0]  %s206, 128, %s208, [#allocation7]
        $region16: #{tpu_custom_call.1} parent=11 // pred_fallthru
          _
        // Predicated region
        $region17: #{tpu_custom_call.1} parent=11 // pred_check
          %p211 = pneg %p112
        $region18: #{tpu_custom_call.1} parent=11 // pred_check_branch
          %213 = sbr.rel (%p211) target = $region20
        $region19: #{tpu_custom_call.1} parent=11 // pred_region
          _
        $region20: #{tpu_custom_call.1} parent=11 // pred_fallthru
          _
        // Predicated region
        $region21: #{tpu_custom_call.1} parent=11 // pred_check
          %p214 = pneg %p133
        $region22: #{tpu_custom_call.1} parent=11 // pred_check_branch
          %216 = sbr.rel (%p214) target = $region24
        $region23: #{tpu_custom_call.1} parent=11 // pred_region
          _
        $region24: #{tpu_custom_call.1} parent=11 // pred_fallthru
          _
        // Predicated region
        $region25: #{tpu_custom_call.1} parent=11 // pred_check
          %p217 = pneg %p154
        $region26: #{tpu_custom_call.1} parent=11 // pred_check_branch
          %219 = sbr.rel (%p217) target = $region28
        $region27: #{tpu_custom_call.1} parent=11 // pred_region
          _
        $region28: #{tpu_custom_call.1} parent=11 // pred_fallthru
          _
      $region12: #{tpu_custom_call.1} parent=5 // pred_fallthru
        _
      %p220 = scmp.lt.s32.totalorder %s25, 2
      // Predicated region
      $region29: #{tpu_custom_call.1} parent=5 // pred_check
        %p221 = pneg %p220
      $region30: #{tpu_custom_call.1} parent=5 // pred_check_branch
        %223 = sbr.rel (%p221) target = $region32
      $region31: #{tpu_custom_call.1} parent=5 // pred_region
        // Predicated region
        $region33: #{tpu_custom_call.1} parent=31 // pred_check
          %p224 = pneg %p59
        $region34: #{tpu_custom_call.1} parent=31 // pred_check_branch
          %226 = sbr.rel (%p224) target = $region36
        $region35: #{tpu_custom_call.1} parent=31 // pred_region
          %p227 = scmp.lt.s32.totalorder %s32, 1
          %s228 = scalar_select %p227, %s32, 1
          %p229 = scmp.lt.s32.totalorder %s33, 0
          %s230 = scalar_select %p229, %s33, 0
          %s231 = sadd.s32 %s230, %s228
          %s232 = smul.addr %s231, 8
          %s233 = scalar_lea.vmem %s1, %s232
        $region36: #{tpu_custom_call.1} parent=31 // pred_fallthru
          _
      $region32: #{tpu_custom_call.1} parent=5 // pred_fallthru
        _
      %p234 = scmp.le.s32.totalorder 1, %s25
      %p235 = scmp.lt.s32.totalorder %s25, 3
      %p236 = pnand %p234, %p235
      %p237 = pneg %p236
      // Predicated region
      $region37: #{tpu_custom_call.1} parent=5 // pred_check
        _
      $region38: #{tpu_custom_call.1} parent=5 // pred_check_branch
        %239 = sbr.rel (%p236) target = $region40
      $region39: #{tpu_custom_call.1} parent=5 // pred_region
        %s240 = ssub.s32 %s25, 1
        // Predicated region
        $region41: #{tpu_custom_call.1} parent=39 // pred_check
          %p241 = pneg %p91
        $region42: #{tpu_custom_call.1} parent=39 // pred_check_branch
          %243 = sbr.rel (%p241) target = $region44
        $region43: #{tpu_custom_call.1} parent=39 // pred_region
          %245 = dma.done [#allocation7], 128
        $region44: #{tpu_custom_call.1} parent=39 // pred_fallthru
          _
        %p246 = scmp.lt.s32.totalorder %s34, 1
        %s247 = scalar_select %p246, %s34, 1
        %p248 = scmp.lt.s32.totalorder %s35, 0
        %s249 = scalar_select %p248, %s35, 0
        %s250 = sadd.s32 %s249, %s247
        %s251 = smul.addr %s250, 8
        %s252 = scalar_lea.vmem %s1, %s251
        %p253 = pneg %p65
        %p254 = pneg %p62
        %p255 = pneg %p91
        %p256 = pneg %p88
        %p257 = pneg %p112
        %p258 = pneg %p109
        %p259 = pneg %p133
        %p260 = pneg %p130
        %p261 = pneg %p154
        %p262 = pneg %p151
        %p263 = pneg %p182
        %p264 = pneg %p179
        %s265 = sand.u32 %s169, 1
        %s266 = scalar_lea.sflag [#allocation8], %s265
        %s267 = sand.u32 %s169, 1
        %s268 = smul.addr %s267, 8
        %s269 = scalar_lea.vmem [#allocation9], %s268
        %p270 = scmp.lt.s32.totalorder %s34, 1
        %s271 = scalar_select %p270, %s34, 1
        %p272 = scmp.lt.s32.totalorder %s35, 0
        %s273 = scalar_select %p272, %s35, 0
        %s274 = sadd.s32 %s273, %s271
        %s275 = smul.addr %s274, 8
        %s276 = scalar_lea.vmem %s1, %s275
        %p277 = scmp.eq.s32.totalorder %s35, 0
        // Predicated region
        $region45: #{tpu_custom_call.1} parent=39 // pred_check
          %p278 = pneg %p277
        $region46: #{tpu_custom_call.1} parent=39 // pred_check_branch
          %280 = sbr.rel (%p278) target = $region48
        $region47: #{tpu_custom_call.1} parent=39 // pred_region
          %s281 = smul.u32 %s34, 8
          %s282 = sld [smem:[#allocation5 + %s281]]
          %s283 = scalar_lea.hbm %s3, %s282
          // Predicated region
          $region49: #{tpu_custom_call.1} parent=47 // pred_check
            _
          $region50: #{tpu_custom_call.1} parent=47 // pred_check_branch
            %285 = sbr.rel target = $region52
          $region51: #{tpu_custom_call.1} parent=47 // pred_region
            %286 = sst [smem:[#allocation12]] [#allocation11]
            %287 = sst [smem:[#allocation13]] [#allocation10]
          $region52: #{tpu_custom_call.1} parent=47 // pred_fallthru
            _
          %289 = shalt.err (0)
          %s291 = sshll.u32 %s283, 4
          %s292 = int_to_ptr.hbm [resolvable:$true] %s291
          %s293 = sshll.u32 [#allocation2], 4
          %s294 = int_to_ptr.vmem [resolvable:$true] %s293
          %296 = dma.hbm_to_vmem [thread:$0]  %s292, 16, %s294, [#allocation3]
          %s297 = sadd.s32 %s281, 1
          %s298 = sld [smem:[#allocation5 + %s297]]
          %s299 = scalar_lea.hbm %s3, %s298
          %s300 = scalar_lea.vmem [#allocation2], 1
          // Predicated region
          $region53: #{tpu_custom_call.1} parent=47 // pred_check
            _
          $region54: #{tpu_custom_call.1} parent=47 // pred_check_branch
            %302 = sbr.rel target = $region56
          $region55: #{tpu_custom_call.1} parent=47 // pred_region
            %303 = sst [smem:[#allocation12]] [#allocation15]
            %304 = sst [smem:[#allocation13]] [#allocation14]
          $region56: #{tpu_custom_call.1} parent=47 // pred_fallthru
            _
          %306 = shalt.err (0)
          %s308 = sshll.u32 %s299, 4
          %s309 = int_to_ptr.hbm [resolvable:$true] %s308
          %s310 = sshll.u32 %s300, 4
          %s311 = int_to_ptr.vmem [resolvable:$true] %s310
          %313 = dma.hbm_to_vmem [thread:$0]  %s309, 16, %s311, [#allocation3]
          %s314 = sadd.s32 %s281, 2
          %s315 = sld [smem:[#allocation5 + %s314]]
          %s316 = scalar_lea.hbm %s3, %s315
          %s317 = scalar_lea.vmem [#allocation2], 2
          // Predicated region
          $region57: #{tpu_custom_call.1} parent=47 // pred_check
            _
          $region58: #{tpu_custom_call.1} parent=47 // pred_check_branch
            %319 = sbr.rel target = $region60
          $region59: #{tpu_custom_call.1} parent=47 // pred_region
            %320 = sst [smem:[#allocation12]] [#allocation17]
            %321 = sst [smem:[#allocation13]] [#allocation16]
          $region60: #{tpu_custom_call.1} parent=47 // pred_fallthru
            _
          %323 = shalt.err (0)
          %s325 = sshll.u32 %s316, 4
          %s326 = int_to_ptr.hbm [resolvable:$true] %s325
          %s327 = sshll.u32 %s317, 4
          %s328 = int_to_ptr.vmem [resolvable:$true] %s327
          %330 = dma.hbm_to_vmem [thread:$0]  %s326, 16, %s328, [#allocation3]
          %s331 = sadd.s32 %s281, 3
          %s332 = sld [smem:[#allocation5 + %s331]]
          %s333 = scalar_lea.hbm %s3, %s332
          %s334 = scalar_lea.vmem [#allocation2], 3
          // Predicated region
          $region61: #{tpu_custom_call.1} parent=47 // pred_check
            _
          $region62: #{tpu_custom_call.1} parent=47 // pred_check_branch
            %336 = sbr.rel target = $region64
          $region63: #{tpu_custom_call.1} parent=47 // pred_region
            %337 = sst [smem:[#allocation12]] [#allocation19]
            %338 = sst [smem:[#allocation13]] [#allocation18]
          $region64: #{tpu_custom_call.1} parent=47 // pred_fallthru
            _
          %340 = shalt.err (0)
          %s342 = sshll.u32 %s333, 4
          %s343 = int_to_ptr.hbm [resolvable:$true] %s342
          %s344 = sshll.u32 %s334, 4
          %s345 = int_to_ptr.vmem [resolvable:$true] %s344
          %347 = dma.hbm_to_vmem [thread:$0]  %s343, 16, %s345, [#allocation3]
          %s348 = sadd.s32 %s281, 4
          %s349 = sld [smem:[#allocation5 + %s348]]
          %s350 = scalar_lea.hbm %s3, %s349
          %s351 = scalar_lea.vmem [#allocation2], 4
          // Predicated region
          $region65: #{tpu_custom_call.1} parent=47 // pred_check
            _
          $region66: #{tpu_custom_call.1} parent=47 // pred_check_branch
            %353 = sbr.rel target = $region68
          $region67: #{tpu_custom_call.1} parent=47 // pred_region
            %354 = sst [smem:[#allocation12]] [#allocation21]
            %355 = sst [smem:[#allocation13]] [#allocation20]
          $region68: #{tpu_custom_call.1} parent=47 // pred_fallthru
            _
          %357 = shalt.err (0)
          %s359 = sshll.u32 %s350, 4
          %s360 = int_to_ptr.hbm [resolvable:$true] %s359
          %s361 = sshll.u32 %s351, 4
          %s362 = int_to_ptr.vmem [resolvable:$true] %s361
          %364 = dma.hbm_to_vmem [thread:$0]  %s360, 16, %s362, [#allocation3]
          %s365 = sadd.s32 %s281, 5
          %s366 = sld [smem:[#allocation5 + %s365]]
          %s367 = scalar_lea.hbm %s3, %s366
          %s368 = scalar_lea.vmem [#allocation2], 5
          // Predicated region
          $region69: #{tpu_custom_call.1} parent=47 // pred_check
            _
          $region70: #{tpu_custom_call.1} parent=47 // pred_check_branch
            %370 = sbr.rel target = $region72
          $region71: #{tpu_custom_call.1} parent=47 // pred_region
            %371 = sst [smem:[#allocation12]] [#allocation23]
            %372 = sst [smem:[#allocation13]] [#allocation22]
          $region72: #{tpu_custom_call.1} parent=47 // pred_fallthru
            _
          %374 = shalt.err (0)
          %s376 = sshll.u32 %s367, 4
          %s377 = int_to_ptr.hbm [resolvable:$true] %s376
          %s378 = sshll.u32 %s368, 4
          %s379 = int_to_ptr.vmem [resolvable:$true] %s378
          %381 = dma.hbm_to_vmem [thread:$0]  %s377, 16, %s379, [#allocation3]
          %s382 = sadd.s32 %s281, 6
          %s383 = sld [smem:[#allocation5 + %s382]]
          %s384 = scalar_lea.hbm %s3, %s383
          %s385 = scalar_lea.vmem [#allocation2], 6
          // Predicated region
          $region73: #{tpu_custom_call.1} parent=47 // pred_check
            _
          $region74: #{tpu_custom_call.1} parent=47 // pred_check_branch
            %387 = sbr.rel target = $region76
          $region75: #{tpu_custom_call.1} parent=47 // pred_region
            %388 = sst [smem:[#allocation12]] [#allocation25]
            %389 = sst [smem:[#allocation13]] [#allocation24]
          $region76: #{tpu_custom_call.1} parent=47 // pred_fallthru
            _
          %391 = shalt.err (0)
          %s393 = sshll.u32 %s384, 4
          %s394 = int_to_ptr.hbm [resolvable:$true] %s393
          %s395 = sshll.u32 %s385, 4
          %s396 = int_to_ptr.vmem [resolvable:$true] %s395
          %398 = dma.hbm_to_vmem [thread:$0]  %s394, 16, %s396, [#allocation3]
          %s399 = sadd.s32 %s281, 7
          %s400 = sld [smem:[#allocation5 + %s399]]
          %s401 = scalar_lea.hbm %s3, %s400
          %s402 = scalar_lea.vmem [#allocation2], 7
          // Predicated region
          $region77: #{tpu_custom_call.1} parent=47 // pred_check
            _
          $region78: #{tpu_custom_call.1} parent=47 // pred_check_branch
            %404 = sbr.rel target = $region80
          $region79: #{tpu_custom_call.1} parent=47 // pred_region
            %405 = sst [smem:[#allocation12]] [#allocation27]
            %406 = sst [smem:[#allocation13]] [#allocation26]
          $region80: #{tpu_custom_call.1} parent=47 // pred_fallthru
            _
          %408 = shalt.err (0)
          %s410 = sshll.u32 %s401, 4
          %s411 = int_to_ptr.hbm [resolvable:$true] %s410
          %s412 = sshll.u32 %s402, 4
          %s413 = int_to_ptr.vmem [resolvable:$true] %s412
          %415 = dma.hbm_to_vmem [thread:$0]  %s411, 16, %s413, [#allocation3]
        $region48: #{tpu_custom_call.1} parent=39 // pred_fallthru
          _
        %s416 = sadd.s32 %s35, 1
        %p417 = scmp.lt.s32.totalorder %s416, 1
        // Predicated region
        $region81: #{tpu_custom_call.1} parent=39 // pred_check
          %p418 = pneg %p417
        $region82: #{tpu_custom_call.1} parent=39 // pred_check_branch
          %420 = sbr.rel (%p418) target = $region84
        $region83: #{tpu_custom_call.1} parent=39 // pred_region
          %s421 = sand.u32 %s416, 1
          %s422 = sadd.s32 %s34, %s416
          %s423 = smul.u32 %s422, 8
          %s424 = sld [smem:[#allocation5 + %s423]]
          %s425 = scalar_lea.hbm %s3, %s424
          %s426 = smul.u32 %s421, 8
          %s427 = scalar_lea.vmem [#allocation2], %s426
          %s428 = scalar_lea.sflag [#allocation3], %s421
          // Predicated region
          $region85: #{tpu_custom_call.1} parent=83 // pred_check
            _
          $region86: #{tpu_custom_call.1} parent=83 // pred_check_branch
            %430 = sbr.rel target = $region88
          $region87: #{tpu_custom_call.1} parent=83 // pred_region
            %431 = sst [smem:[#allocation12]] [#allocation29]
            %432 = sst [smem:[#allocation13]] [#allocation28]
          $region88: #{tpu_custom_call.1} parent=83 // pred_fallthru
            _
          %434 = shalt.err (0)
          %s436 = sshll.u32 %s425, 4
          %s437 = int_to_ptr.hbm [resolvable:$true] %s436
          %s438 = sshll.u32 %s427, 4
          %s439 = int_to_ptr.vmem [resolvable:$true] %s438
          %441 = dma.hbm_to_vmem [thread:$0]  %s437, 16, %s439, %s428
          %s442 = sadd.s32 %s423, 1
          %s443 = sld [smem:[#allocation5 + %s442]]
          %s444 = scalar_lea.hbm %s3, %s443
          %s445 = sadd.s32 1, %s426
          %s446 = scalar_lea.vmem [#allocation2], %s445
          // Predicated region
          $region89: #{tpu_custom_call.1} parent=83 // pred_check
            _
          $region90: #{tpu_custom_call.1} parent=83 // pred_check_branch
            %448 = sbr.rel target = $region92
          $region91: #{tpu_custom_call.1} parent=83 // pred_region
            %449 = sst [smem:[#allocation12]] [#allocation31]
            %450 = sst [smem:[#allocation13]] [#allocation30]
          $region92: #{tpu_custom_call.1} parent=83 // pred_fallthru
            _
          %452 = shalt.err (0)
          %s454 = sshll.u32 %s444, 4
          %s455 = int_to_ptr.hbm [resolvable:$true] %s454
          %s456 = sshll.u32 %s446, 4
          %s457 = int_to_ptr.vmem [resolvable:$true] %s456
          %459 = dma.hbm_to_vmem [thread:$0]  %s455, 16, %s457, %s428
          %s460 = sadd.s32 %s423, 2
          %s461 = sld [smem:[#allocation5 + %s460]]
          %s462 = scalar_lea.hbm %s3, %s461
          %s463 = sadd.s32 2, %s426
          %s464 = scalar_lea.vmem [#allocation2], %s463
          // Predicated region
          $region93: #{tpu_custom_call.1} parent=83 // pred_check
            _
          $region94: #{tpu_custom_call.1} parent=83 // pred_check_branch
            %466 = sbr.rel target = $region96
          $region95: #{tpu_custom_call.1} parent=83 // pred_region
            %467 = sst [smem:[#allocation12]] [#allocation33]
            %468 = sst [smem:[#allocation13]] [#allocation32]
          $region96: #{tpu_custom_call.1} parent=83 // pred_fallthru
            _
          %470 = shalt.err (0)
          %s472 = sshll.u32 %s462, 4
          %s473 = int_to_ptr.hbm [resolvable:$true] %s472
          %s474 = sshll.u32 %s464, 4
          %s475 = int_to_ptr.vmem [resolvable:$true] %s474
          %477 = dma.hbm_to_vmem [thread:$0]  %s473, 16, %s475, %s428
          %s478 = sadd.s32 %s423, 3
          %s479 = sld [smem:[#allocation5 + %s478]]
          %s480 = scalar_lea.hbm %s3, %s479
          %s481 = sadd.s32 3, %s426
          %s482 = scalar_lea.vmem [#allocation2], %s481
          // Predicated region
          $region97: #{tpu_custom_call.1} parent=83 // pred_check
            _
          $region98: #{tpu_custom_call.1} parent=83 // pred_check_branch
            %484 = sbr.rel target = $region100
          $region99: #{tpu_custom_call.1} parent=83 // pred_region
            %485 = sst [smem:[#allocation12]] [#allocation35]
            %486 = sst [smem:[#allocation13]] [#allocation34]
          $region100: #{tpu_custom_call.1} parent=83 // pred_fallthru
            _
          %488 = shalt.err (0)
          %s490 = sshll.u32 %s480, 4
          %s491 = int_to_ptr.hbm [resolvable:$true] %s490
          %s492 = sshll.u32 %s482, 4
          %s493 = int_to_ptr.vmem [resolvable:$true] %s492
          %495 = dma.hbm_to_vmem [thread:$0]  %s491, 16, %s493, %s428
          %s496 = sadd.s32 %s423, 4
          %s497 = sld [smem:[#allocation5 + %s496]]
          %s498 = scalar_lea.hbm %s3, %s497
          %s499 = sadd.s32 4, %s426
          %s500 = scalar_lea.vmem [#allocation2], %s499
          // Predicated region
          $region101: #{tpu_custom_call.1} parent=83 // pred_check
            _
          $region102: #{tpu_custom_call.1} parent=83 // pred_check_branch
            %502 = sbr.rel target = $region104
          $region103: #{tpu_custom_call.1} parent=83 // pred_region
            %503 = sst [smem:[#allocation12]] [#allocation37]
            %504 = sst [smem:[#allocation13]] [#allocation36]
          $region104: #{tpu_custom_call.1} parent=83 // pred_fallthru
            _
          %506 = shalt.err (0)
          %s508 = sshll.u32 %s498, 4
          %s509 = int_to_ptr.hbm [resolvable:$true] %s508
          %s510 = sshll.u32 %s500, 4
          %s511 = int_to_ptr.vmem [resolvable:$true] %s510
          %513 = dma.hbm_to_vmem [thread:$0]  %s509, 16, %s511, %s428
          %s514 = sadd.s32 %s423, 5
          %s515 = sld [smem:[#allocation5 + %s514]]
          %s516 = scalar_lea.hbm %s3, %s515
          %s517 = sadd.s32 5, %s426
          %s518 = scalar_lea.vmem [#allocation2], %s517
          // Predicated region
          $region105: #{tpu_custom_call.1} parent=83 // pred_check
            _
          $region106: #{tpu_custom_call.1} parent=83 // pred_check_branch
            %520 = sbr.rel target = $region108
          $region107: #{tpu_custom_call.1} parent=83 // pred_region
            %521 = sst [smem:[#allocation12]] [#allocation39]
            %522 = sst [smem:[#allocation13]] [#allocation38]
          $region108: #{tpu_custom_call.1} parent=83 // pred_fallthru
            _
          %524 = shalt.err (0)
          %s526 = sshll.u32 %s516, 4
          %s527 = int_to_ptr.hbm [resolvable:$true] %s526
          %s528 = sshll.u32 %s518, 4
          %s529 = int_to_ptr.vmem [resolvable:$true] %s528
          %531 = dma.hbm_to_vmem [thread:$0]  %s527, 16, %s529, %s428
          %s532 = sadd.s32 %s423, 6
          %s533 = sld [smem:[#allocation5 + %s532]]
          %s534 = scalar_lea.hbm %s3, %s533
          %s535 = sadd.s32 6, %s426
          %s536 = scalar_lea.vmem [#allocation2], %s535
          // Predicated region
          $region109: #{tpu_custom_call.1} parent=83 // pred_check
            _
          $region110: #{tpu_custom_call.1} parent=83 // pred_check_branch
            %538 = sbr.rel target = $region112
          $region111: #{tpu_custom_call.1} parent=83 // pred_region
            %539 = sst [smem:[#allocation12]] [#allocation41]
            %540 = sst [smem:[#allocation13]] [#allocation40]
          $region112: #{tpu_custom_call.1} parent=83 // pred_fallthru
            _
          %542 = shalt.err (0)
          %s544 = sshll.u32 %s534, 4
          %s545 = int_to_ptr.hbm [resolvable:$true] %s544
          %s546 = sshll.u32 %s536, 4
          %s547 = int_to_ptr.vmem [resolvable:$true] %s546
          %549 = dma.hbm_to_vmem [thread:$0]  %s545, 16, %s547, %s428
          %s550 = sadd.s32 %s423, 7
          %s551 = sld [smem:[#allocation5 + %s550]]
          %s552 = scalar_lea.hbm %s3, %s551
          %s553 = sadd.s32 7, %s426
          %s554 = scalar_lea.vmem [#allocation2], %s553
          // Predicated region
          $region113: #{tpu_custom_call.1} parent=83 // pred_check
            _
          $region114: #{tpu_custom_call.1} parent=83 // pred_check_branch
            %556 = sbr.rel target = $region116
          $region115: #{tpu_custom_call.1} parent=83 // pred_region
            %557 = sst [smem:[#allocation12]] [#allocation43]
            %558 = sst [smem:[#allocation13]] [#allocation42]
          $region116: #{tpu_custom_call.1} parent=83 // pred_fallthru
            _
          %560 = shalt.err (0)
          %s562 = sshll.u32 %s552, 4
          %s563 = int_to_ptr.hbm [resolvable:$true] %s562
          %s564 = sshll.u32 %s554, 4
          %s565 = int_to_ptr.vmem [resolvable:$true] %s564
          %567 = dma.hbm_to_vmem [thread:$0]  %s563, 16, %s565, %s428
        $region84: #{tpu_custom_call.1} parent=39 // pred_fallthru
          _
        %v568 = vld [vmem:[%s276] sm:$0xff]
        %v569 = vld [vmem:[%s4] sm:$0x1]
        %v570 = vld [vmem:[%s4 + $0x1] sm:$0x1]
        %v571 = vsub.f32 %v570, %v569
        %573 = vset.pattern.permute.xlu0 0
        %574 = vperm.xlu0 %573, %v568
        %v575 = vpop.permute.xlu0 %574
        %v577 = vperm.slane %v571, 0
        %v578 = vmul.f32 %v575, %v577
        %v579 = vperm.slane %v569, 0
        %v580 = vadd.f32 %v579, %v578
        %v581 = vld [vmem:[#allocation6] sm:$0xff]
        %v582 = vld [vmem:[%s5] sm:$0x1]
        %v583 = vld [vmem:[%s6] sm:$0x1]
        %s584 = sand.u32 %s35, 1
        %s585 = smul.u32 %s584, 8
        %s586 = scalar_lea.vmem [#allocation2], %s585
        %s587 = scalar_lea.sflag [#allocation3], %s584
        %s588 = smul.u32 8, 1
        %s589 = sshll.u32 %s588, 4
        %590 = dma.done %s587, %s589
        %v591 = vld [vmem:[%s586] sm:$0xff]
        %v592 = vadd.f32 %v591, %v581
        %v593 = vadd.f32 %v592, %v580
        %594 = vadd.xlane.f32.xlu0 %v593
        %v595 = vpop.xlane.xlu0 %594
        %v596 = vrcp.pop 128.0
        %v597 = vmul.f32 128.0, %v596
        %v598 = vsub.f32 1.0, %v597
        %v599 = vmul.f32 %v596, %v598
        %v600 = vadd.f32 %v596, %v599
        %vm601 = vweird.f32 %v596
        %v602 = vsel %vm601, %v596, %v600
        %v603 = vmul.f32 %v595, %v602
        %v604 = vsub.f32 %v593, %v603
        %v605 = vmul.f32 %v604, %v604
        %606 = vadd.xlane.f32.xlu0 %v605
        %v607 = vpop.xlane.xlu0 %606
        %v608 = vmul.f32 %v607, %v602
        %v609 = vadd.f32 %v608, 1e-12
        %v610 = vrsqrt.pop %v609
        %v611 = vmul.f32 %v610, %v609
        %v612 = vmul.f32 %v611, %v610
        %v613 = vmul.f32 0.5, %v612
        %v614 = vsub.f32 1.5, %v613
        %v615 = vmul.f32 %v610, %v614
        %vm616 = vweird.f32 %v609
        %vm617 = vweird.f32 %v610
        %vm618 = vmor %vm616, %vm617
        %v619 = vsel %vm618, %v610, %v615
        %v620 = vmul.f32 %v604, %v619
        %v622 = vperm.slane %v582, 0
        %v624 = vmul.f32 %v620, %v622
        %v626 = vperm.slane %v583, 0
        %v628 = vadd.f32 %v624, %v626
        %629 = vst [vmem:[%s269] sm:$0xff] %v628
        %s630 = sand.u32 %s169, 1
        %s631 = scalar_lea.sflag [#allocation8], %s630
        %s632 = sand.u32 %s169, 1
        %s633 = smul.addr %s632, 8
        %s634 = scalar_lea.vmem [#allocation9], %s633
        // Predicated region
        $region117: #{tpu_custom_call.1} parent=39 // pred_check
          %p635 = pneg %p179
        $region118: #{tpu_custom_call.1} parent=39 // pred_check_branch
          %637 = sbr.rel (%p635) target = $region120
        $region119: #{tpu_custom_call.1} parent=39 // pred_region
          %639 = vsyncadd %s631, 0
          %s640 = sadd.s32 %s35, %s34
          %s641 = smul.addr %s640, 8
          %s642 = scalar_lea.hbm %s7, %s641
          %s644 = sshll.u32 %s634, 4
          %s645 = int_to_ptr.vmem [resolvable:$true] %s644
          %s646 = sshll.u32 %s642, 4
          %s647 = int_to_ptr.hbm [resolvable:$true] %s646
          %649 = dma.vmem_to_hbm [thread:$0]  %s645, 128, %s647, %s631
        $region120: #{tpu_custom_call.1} parent=39 // pred_fallthru
          _
      $region40: #{tpu_custom_call.1} parent=5 // pred_fallthru
        _
      %p650 = scmp.le.s32.totalorder 2, %s25
      // Predicated region
      $region121: #{tpu_custom_call.1} parent=5 // pred_check
        %p651 = pneg %p650
      $region122: #{tpu_custom_call.1} parent=5 // pred_check_branch
        %653 = sbr.rel (%p651) target = $region124
      $region123: #{tpu_custom_call.1} parent=5 // pred_region
        %s654 = ssub.s32 %s25, 2
        // Predicated region
        $region125: #{tpu_custom_call.1} parent=123 // pred_check
          %p655 = pneg %p185
        $region126: #{tpu_custom_call.1} parent=123 // pred_check_branch
          %657 = sbr.rel (%p655) target = $region128
        $region127: #{tpu_custom_call.1} parent=123 // pred_region
          %s658 = sand.u32 %s170, 1
          %s659 = scalar_lea.sflag [#allocation8], %s658
          %s660 = sand.u32 %s170, 1
          %s661 = smul.addr %s660, 8
          %s662 = scalar_lea.vmem [#allocation9], %s661
          %664 = dma.done %s659, 128
        $region128: #{tpu_custom_call.1} parent=123 // pred_fallthru
          _
      $region124: #{tpu_custom_call.1} parent=5 // pred_fallthru
        _
    $region6: #{tpu_custom_call.1} parent=1 // loop_footer
      %s29 = sadd.s32 1, %s25
    $region7: #{tpu_custom_call.1} parent=1 // loop_footer_branch
      %24 = sbr.rel target = $region3
    $region8: #{tpu_custom_call.1} parent=1 // loop_exit
      _
    %665 = vsyncpa [#allocation7], 1
    %s666 = scalar_lea.sflag [#allocation7], 1
    %667 = vsyncpa %s666, 1
    %668 = vsyncpa [#allocation8], 1
    %s669 = scalar_lea.sflag [#allocation8], 1
    %670 = vsyncpa %s669, 1
  %671 = vsyncmov [#allocation3]
  %s672 = vpop.sfrf %671
  %p673 = scmp.eq.s32.totalorder %s672, 0
  %p674 = pneg %p673
  %676 = shalt.err (%p674)
  %s677 = scalar_lea.sflag [#allocation3], 1
  %678 = vsyncmov %s677
  %s679 = vpop.sfrf %678
  %p680 = scmp.eq.s32.totalorder %s679, 0
  %p681 = pneg %p680
  %683 = shalt.err (%p681)

</llo_original>
